<compile_context>
chip_gen: v7x
topology: tpu7x:2x2x1
jax: 0.10.0
libtpu: 0.0.40
codegen_flags: <defaults>
</compile_context>

<pallas_src>
import functools

import jax
import jax.numpy as jnp
from jax import lax
from jax.experimental import pallas as pl
from jax.experimental.pallas import tpu as pltpu


def coordatt_kernel(x_ref, w1_ref, b1_ref, w2_ref, b2_ref, w3_ref, b3_ref,
                    pc_ref, eht_ref, ewt_ref, o_ref, *, h, w, nb):
    """One grid step: nb images in channel-major (c, h*w) layout, no transposes."""
    f32 = jnp.float32
    io = o_ref.dtype
    mip = w1_ref.shape[0]
    oup = w2_ref.shape[0]

    # ---- hoisted once per grid step (JAX does not CSE broadcast_in_dim) ----
    w1 = w1_ref[...]                                   # (mip, c)  conv1 w/ BN folded
    w2 = w2_ref[...]                                   # (oup, mip)
    w3 = w3_ref[...]                                   # (oup, mip)
    b1 = jnp.broadcast_to(b1_ref[...], (mip, h + w))   # fused conv1+BN bias
    b2 = jnp.broadcast_to(b2_ref[...], (oup, h))
    b3 = jnp.broadcast_to(b3_ref[...], (oup, w))
    pc = pc_ref[...].astype(io)                        # (h*w, h+w) one-hot pooling (sums)
    eht = eht_ref[...].astype(io)                      # (h, h*w) row-gate broadcast
    ewt = ewt_ref[...].astype(io)                      # (w, h*w) col-gate broadcast
    # Per-column mean scale: first h columns are sums over w, last w are sums over h.
    col = lax.broadcasted_iota(jnp.int32, (mip, h + w), 1)
    inv = jnp.where(col < h, f32(1.0 / w), f32(1.0 / h))

    dotf = functools.partial(jnp.dot, preferred_element_type=f32)

    def body(b, carry):
        xb = x_ref[b]                                    # (c, h*w), stays in io dtype
        pooled = dotf(xb, pc)                            # (c, h+w) f32 row/col sums
        y = dotf(w1, pooled) * inv + b1                  # (mip, h+w) conv1 + folded BN
        y = y * (jnp.clip(y + 3.0, 0.0, 6.0) * (1.0 / 6.0))          # h_swish
        g_h = jax.nn.sigmoid(dotf(w2, y[:, :h]) + b2)    # (oup, h) per-row gate
        g_w = jax.nn.sigmoid(dotf(w3, y[:, h:]) + b3)    # (oup, w) per-col gate
        # One-hot expansion back to the flat lane axis; output directly in io dtype
        # so the big elementwise multiply + store never touch f32.
        gate = (jnp.dot(g_h.astype(io), eht, preferred_element_type=io) *
                jnp.dot(g_w.astype(io), ewt, preferred_element_type=io))   # (oup, h*w)
        o_ref[b] = xb * gate
        return carry

    lax.fori_loop(0, nb, body, 0, unroll=nb <= 4)


def _vmem_capacity_bytes(default=64 * 1024 * 1024):
    try:
        info = pltpu.get_tpu_info()
        for name in ("vmem_capacity_bytes", "vmem_bytes", "vmem_size_bytes"):
            val = getattr(info, name, None)
            if val:
                return int(val)
    except Exception:
        pass
    return default


def coord_att(x, params, *, eps=1e-5):
    """x: (n, c, h, w), f32 or bf16. params: (conv1 w/b, bn g/b/mean/var, conv2 w/b, conv3 w/b)."""
    n, c, h, w = x.shape
    w1, b1, gamma, beta, mean, var, w2, b2, w3, b3 = params
    mip = w1.shape[0]
    oup = w2.shape[0]
    assert oup == c, "CoordAtt output gate channels must match input channels"
    f32 = jnp.float32
    hw = h * w

    # Fold inference BatchNorm into conv1 (host side, free).
    scale = gamma.astype(f32) * lax.rsqrt(var.astype(f32) + eps)
    w1f = w1.astype(f32) * scale[:, None]                                # (mip, c)
    b1f = ((b1.astype(f32) - mean.astype(f32)) * scale
           + beta.astype(f32)).reshape(mip, 1)                           # (mip, 1)
    w2f = w2.astype(f32)
    b2f = b2.astype(f32).reshape(oup, 1)
    w3f = w3.astype(f32)
    b3f = b3.astype(f32).reshape(oup, 1)

    # Exact 0/1 one-hot pooling / gate-broadcast matrices, stored in bf16
    # (0/1 are exact in bf16; the 1/w, 1/h mean scale is applied in f32 in-kernel).
    pos = jnp.arange(hw)
    e_h = (pos // w)[:, None] == jnp.arange(h)[None, :]                  # (hw, h)
    e_w = (pos % w)[:, None] == jnp.arange(w)[None, :]                   # (hw, w)
    pool_cat = jnp.concatenate([e_h, e_w], axis=1).astype(jnp.bfloat16)  # (hw, h+w)
    e_ht = e_h.T.astype(jnp.bfloat16)                                    # (h, hw)
    e_wt = e_w.T.astype(jnp.bfloat16)                                    # (w, hw)

    x_flat = x.reshape(n, c, hw)   # contiguous reshape: free

    # ---- generation-aware sizing -------------------------------------------
    vmem_cap = _vmem_capacity_bytes()                       # 128 MiB v5e/v6e, 64 MiB v7x
    vmem_limit = int(min(vmem_cap * 3 // 4, 100 * 1024 * 1024))
    const_bytes = 2 * 2 * (pool_cat.size + e_ht.size + e_wt.size)        # worst case 2-buffered bf16
    const_bytes += 2 * 4 * (w1f.size + b1f.size + w2f.size + b2f.size + w3f.size + b3f.size)
    itemsize = x.dtype.itemsize
    live_bytes = 3 * c * hw * max(itemsize, 4)              # xb + gate + expansion temps
    usable = vmem_limit - const_bytes - live_bytes - (4 << 20)

    # Largest nb dividing n that fits the double-buffered in+out x blocks while
    # keeping >= min(8, n) grid steps (>= 4 per v7x TensorCore for pipelining).
    min_steps = min(8, n)
    nb = 1
    for cand in range(n, 0, -1):
        if n % cand:
            continue
        if (n // cand) < min_steps:
            continue
        if cand > 1 and 2 * 2 * cand * c * hw * itemsize > usable:
            continue
        nb = cand
        break
    grid = (n // nb,)

    kernel = functools.partial(coordatt_kernel, h=h, w=w, nb=nb)

    def build(single_buffer_consts):
        def cspec(shape):
            ndim = len(shape)
            if single_buffer_consts:
                return pl.BlockSpec(shape, lambda *i: (0,) * ndim,
                                    pipeline_mode=pl.Buffered(1))
            return pl.BlockSpec(shape, lambda *i: (0,) * ndim)

        in_specs = [
            pl.BlockSpec((nb, c, hw), lambda i: (i, 0, 0)),   # x (lane-dense stream)
            cspec((mip, c)),                                  # fused conv1 weight
            cspec((mip, 1)),                                  # fused conv1 bias
            cspec((oup, mip)),                                # conv2 weight
            cspec((oup, 1)),                                  # conv2 bias
            cspec((oup, mip)),                                # conv3 weight
            cspec((oup, 1)),                                  # conv3 bias
            cspec((hw, h + w)),                               # fused pooling one-hots
            cspec((h, hw)),                                   # h-gate broadcast
            cspec((w, hw)),                                   # w-gate broadcast
        ]
        return pl.pallas_call(
            kernel,
            out_shape=jax.ShapeDtypeStruct((n, c, hw), x.dtype),
            grid_spec=pltpu.PrefetchScalarGridSpec(
                num_scalar_prefetch=0,
                grid=grid,
                in_specs=in_specs,
                out_specs=pl.BlockSpec((nb, c, hw), lambda i: (i, 0, 0)),
            ),
            compiler_params=pltpu.CompilerParams(
                dimension_semantics=("parallel",),
                vmem_limit_bytes=vmem_limit),
        )

    args = (x_flat, w1f, b1f, w2f, b2f, w3f, b3f, pool_cat, e_ht, e_wt)
    try:
        out = jax.block_until_ready(build(True)(*args))
    except Exception:
        # pl.Buffered(1) not accepted by this jax/libtpu combo: identical kernel,
        # default double-buffered constant specs.
        out = jax.block_until_ready(build(False)(*args))
    return out.reshape(n, c, h, w)


def coord_att_ref(x, params, eps=1e-5):
    """Pure-JAX reference mirroring the PyTorch forward (f32, eval-mode BN)."""
    w1, b1, gamma, beta, mean, var, w2, b2, w3, b3 = params
    n, c, h, w = x.shape
    x_h = jnp.mean(x, axis=3, keepdims=True)                 # (n,c,h,1)
    x_w = jnp.mean(x, axis=2, keepdims=True)                 # (n,c,1,w)
    x_w = jnp.transpose(x_w, (0, 1, 3, 2))                   # (n,c,w,1)
    y = jnp.concatenate([x_h, x_w], axis=2)                  # (n,c,h+w,1)

    y = jnp.einsum('mc,nclk->nmlk', w1, y) + b1[None, :, None, None]
    y = (y - mean[None, :, None, None]) / jnp.sqrt(var[None, :, None, None] + eps)
    y = y * gamma[None, :, None, None] + beta[None, :, None, None]
    y = y * jnp.clip(y + 3.0, 0.0, 6.0) / 6.0

    a_h = y[:, :, :h]                                        # (n,mip,h,1)
    a_w = jnp.transpose(y[:, :, h:], (0, 1, 3, 2))           # (n,mip,1,w)
    g_h = jax.nn.sigmoid(jnp.einsum('om,nmlk->nolk', w2, a_h)
                         + b2[None, :, None, None])          # (n,oup,h,1)
    g_w = jax.nn.sigmoid(jnp.einsum('om,nmlk->nolk', w3, a_w)
                         + b3[None, :, None, None])          # (n,oup,1,w)
    return x * g_w * g_h


if __name__ == "__main__":
    n, c, h, w = 2, 4, 16, 16
    groups = 32
    inp = oup = c
    mip = max(8, inp // groups)

    key = jax.random.PRNGKey(0)
    ks = jax.random.split(key, 12)
    x = jax.random.normal(ks[0], (n, c, h, w), jnp.float32)

    params = (
        0.2 * jax.random.normal(ks[1], (mip, inp), jnp.float32),   # conv1 weight
        0.1 * jax.random.normal(ks[2], (mip,), jnp.float32),       # conv1 bias
        1.0 + 0.1 * jax.random.normal(ks[3], (mip,), jnp.float32), # bn gamma
        0.1 * jax.random.normal(ks[4], (mip,), jnp.float32),       # bn beta
        0.1 * jax.random.normal(ks[5], (mip,), jnp.float32),       # bn running_mean
        jnp.abs(1.0 + 0.1 * jax.random.normal(ks[6], (mip,), jnp.float32)),  # bn var
        0.2 * jax.random.normal(ks[7], (oup, mip), jnp.float32),   # conv2 weight
        0.1 * jax.random.normal(ks[8], (oup,), jnp.float32),       # conv2 bias
        0.2 * jax.random.normal(ks[9], (oup, mip), jnp.float32),   # conv3 weight
        0.1 * jax.random.normal(ks[10], (oup,), jnp.float32),      # conv3 bias
    )

    ref = jax.block_until_ready(coord_att_ref(x, params))

    # f32 I/O path.
    out = jax.block_until_ready(coord_att(x, params))
    assert out.shape == (n, c, h, w)
    assert jnp.allclose(out, ref, rtol=1e-4, atol=1e-4), (
        float(jnp.max(jnp.abs(out - ref))))

    # bf16 I/O path (halved HBM traffic; gates/pooling accumulate in f32).
    out_bf16 = jax.block_until_ready(coord_att(x.astype(jnp.bfloat16), params))
    assert out_bf16.dtype == jnp.bfloat16
    assert jnp.allclose(out_bf16.astype(jnp.float32), ref, rtol=1e-1, atol=1e-1), (
        float(jnp.max(jnp.abs(out_bf16.astype(jnp.float32) - ref))))

    print("KERNEL_OK")
</pallas_src>

<mosaic_0001>
module attributes {stable_mosaic.version = 11 : i64} {
  func.func @coordatt_kernel(%arg0: i32, %arg1: memref<1x4x256xf32, #tpu.memory_space<vmem>>, %arg2: memref<8x4xf32, #tpu.memory_space<vmem>>, %arg3: memref<8x1xf32, #tpu.memory_space<vmem>>, %arg4: memref<4x8xf32, #tpu.memory_space<vmem>>, %arg5: memref<4x1xf32, #tpu.memory_space<vmem>>, %arg6: memref<4x8xf32, #tpu.memory_space<vmem>>, %arg7: memref<4x1xf32, #tpu.memory_space<vmem>>, %arg8: memref<256x32xbf16, #tpu.memory_space<vmem>>, %arg9: memref<16x256xbf16, #tpu.memory_space<vmem>>, %arg10: memref<16x256xbf16, #tpu.memory_space<vmem>>, %arg11: memref<1x4x256xf32, #tpu.memory_space<vmem>>) attributes {dimension_semantics = [#tpu.dimension_semantics<parallel>], iteration_bounds = array<i64: 2>, scalar_prefetch = 0 : i64, scratch_operands = 0 : i64, tpu.core_type = #tpu.core_type<tc>, window_params = [{transform_indices = @transform_0, window_bounds = array<i64: 1, 4, 256>}, {pipeline_mode = #tpu.pipeline_mode<synchronous>, transform_indices = @transform_1, window_bounds = array<i64: 8, 4>}, {pipeline_mode = #tpu.pipeline_mode<synchronous>, transform_indices = @transform_2, window_bounds = array<i64: 8, 1>}, {pipeline_mode = #tpu.pipeline_mode<synchronous>, transform_indices = @transform_3, window_bounds = array<i64: 4, 8>}, {pipeline_mode = #tpu.pipeline_mode<synchronous>, transform_indices = @transform_4, window_bounds = array<i64: 4, 1>}, {pipeline_mode = #tpu.pipeline_mode<synchronous>, transform_indices = @transform_5, window_bounds = array<i64: 4, 8>}, {pipeline_mode = #tpu.pipeline_mode<synchronous>, transform_indices = @transform_6, window_bounds = array<i64: 4, 1>}, {pipeline_mode = #tpu.pipeline_mode<synchronous>, transform_indices = @transform_7, window_bounds = array<i64: 256, 32>}, {pipeline_mode = #tpu.pipeline_mode<synchronous>, transform_indices = @transform_8, window_bounds = array<i64: 16, 256>}, {pipeline_mode = #tpu.pipeline_mode<synchronous>, transform_indices = @transform_9, window_bounds = array<i64: 16, 256>}, {transform_indices = @transform_10, window_bounds = array<i64: 1, 4, 256>}]} {
    %c0 = arith.constant 0 : index
    %c0_0 = arith.constant 0 : index
    %0 = vector.load %arg2[%c0, %c0_0] : memref<8x4xf32, #tpu.memory_space<vmem>>, vector<8x4xf32>
    %c0_1 = arith.constant 0 : index
    %c0_2 = arith.constant 0 : index
    %1 = vector.load %arg4[%c0_1, %c0_2] : memref<4x8xf32, #tpu.memory_space<vmem>>, vector<4x8xf32>
    %c0_3 = arith.constant 0 : index
    %c0_4 = arith.constant 0 : index
    %2 = vector.load %arg6[%c0_3, %c0_4] : memref<4x8xf32, #tpu.memory_space<vmem>>, vector<4x8xf32>
    %c0_5 = arith.constant 0 : index
    %c0_6 = arith.constant 0 : index
    %3 = vector.load %arg3[%c0_5, %c0_6] : memref<8x1xf32, #tpu.memory_space<vmem>>, vector<8x1xf32>
    %4 = vector.shape_cast %3 : vector<8x1xf32> to vector<8x1xf32>
    %5 = vector.broadcast %4 : vector<8x1xf32> to vector<8x32xf32>
    %c0_7 = arith.constant 0 : index
    %c0_8 = arith.constant 0 : index
    %6 = vector.load %arg5[%c0_7, %c0_8] : memref<4x1xf32, #tpu.memory_space<vmem>>, vector<4x1xf32>
    %7 = vector.shape_cast %6 : vector<4x1xf32> to vector<4x1xf32>
    %8 = vector.broadcast %7 : vector<4x1xf32> to vector<4x16xf32>
    %c0_9 = arith.constant 0 : index
    %c0_10 = arith.constant 0 : index
    %9 = vector.load %arg7[%c0_9, %c0_10] : memref<4x1xf32, #tpu.memory_space<vmem>>, vector<4x1xf32>
    %10 = vector.shape_cast %9 : vector<4x1xf32> to vector<4x1xf32>
    %11 = vector.broadcast %10 : vector<4x1xf32> to vector<4x16xf32>
    %c0_11 = arith.constant 0 : index
    %c0_12 = arith.constant 0 : index
    %12 = vector.load %arg8[%c0_11, %c0_12] : memref<256x32xbf16, #tpu.memory_space<vmem>>, vector<256x32xbf16>
    %13 = arith.extf %12 : vector<256x32xbf16> to vector<256x32xf32>
    %c0_13 = arith.constant 0 : index
    %c0_14 = arith.constant 0 : index
    %14 = vector.load %arg9[%c0_13, %c0_14] : memref<16x256xbf16, #tpu.memory_space<vmem>>, vector<16x256xbf16>
    %15 = arith.extf %14 : vector<16x256xbf16> to vector<16x256xf32>
    %c0_15 = arith.constant 0 : index
    %c0_16 = arith.constant 0 : index
    %16 = vector.load %arg10[%c0_15, %c0_16] : memref<16x256xbf16, #tpu.memory_space<vmem>>, vector<16x256xbf16>
    %17 = arith.extf %16 : vector<16x256xbf16> to vector<16x256xf32>
    %18 = tpu.iota {dimensions = array<i32: 1>} : vector<8x32xi32>
    %c16_i32 = arith.constant 16 : i32
    %19 = vector.broadcast %c16_i32 : i32 to vector<8x32xi32>
    %20 = arith.cmpi slt, %18, %19 : vector<8x32xi32>
    %cst = arith.constant 6.250000e-02 : f32
    %cst_17 = arith.constant 6.250000e-02 : f32
    %21 = vector.broadcast %cst : f32 to vector<8x32xf32>
    %22 = vector.broadcast %cst_17 : f32 to vector<8x32xf32>
    %23 = arith.select %20, %21, %22 : vector<8x32xi1>, vector<8x32xf32>
    %c0_i32 = arith.constant 0 : i32
    %24 = arith.index_cast %c0_i32 : i32 to index
    %c0_18 = arith.constant 0 : index
    %c0_19 = arith.constant 0 : index
    %25 = vector.load %arg1[%24, %c0_18, %c0_19] : memref<1x4x256xf32, #tpu.memory_space<vmem>>, vector<1x4x256xf32>
    %26 = vector.shape_cast %25 : vector<1x4x256xf32> to vector<4x256xf32>
    %cst_20 = arith.constant dense<0.000000e+00> : vector<4x32xf32>
    %27 = tpu.matmul %26, %13, %cst_20 {dimension_numbers = #tpu.dot_dimension_numbers<[1], [0], [0], [1], [0, 0, 1, 1], [], []>} : vector<4x256xf32>, vector<256x32xf32>, vector<4x32xf32> -> vector<4x32xf32>
    %cst_21 = arith.constant dense<0.000000e+00> : vector<8x32xf32>
    %28 = tpu.matmul %0, %27, %cst_21 {dimension_numbers = #tpu.dot_dimension_numbers<[1], [0], [0], [1], [0, 0, 1, 1], [], []>} : vector<8x4xf32>, vector<4x32xf32>, vector<8x32xf32> -> vector<8x32xf32>
    %29 = arith.mulf %28, %23 : vector<8x32xf32>
    %30 = arith.addf %29, %5 : vector<8x32xf32>
    %cst_22 = arith.constant 3.000000e+00 : f32
    %31 = vector.broadcast %cst_22 : f32 to vector<8x32xf32>
    %32 = arith.addf %30, %31 : vector<8x32xf32>
    %cst_23 = arith.constant 0.000000e+00 : f32
    %cst_24 = arith.constant 6.000000e+00 : f32
    %33 = vector.broadcast %cst_23 : f32 to vector<8x32xf32>
    %34 = arith.maximumf %33, %32 : vector<8x32xf32>
    %35 = vector.broadcast %cst_24 : f32 to vector<8x32xf32>
    %36 = arith.minimumf %35, %34 : vector<8x32xf32>
    %cst_25 = arith.constant 0.166666672 : f32
    %37 = vector.broadcast %cst_25 : f32 to vector<8x32xf32>
    %38 = arith.mulf %36, %37 : vector<8x32xf32>
    %39 = arith.mulf %30, %38 : vector<8x32xf32>
    %40 = vector.extract_strided_slice %39 {offsets = [0, 0], sizes = [8, 16], strides = [1, 1]} : vector<8x32xf32> to vector<8x16xf32>
    %cst_26 = arith.constant dense<0.000000e+00> : vector<4x16xf32>
    %41 = tpu.matmul %1, %40, %cst_26 {dimension_numbers = #tpu.dot_dimension_numbers<[1], [0], [0], [1], [0, 0, 1, 1], [], []>} : vector<4x8xf32>, vector<8x16xf32>, vector<4x16xf32> -> vector<4x16xf32>
    %42 = arith.addf %41, %8 : vector<4x16xf32>
    %43 = arith.negf %42 : vector<4x16xf32>
    %44 = math.exp %43 : vector<4x16xf32>
    %cst_27 = arith.constant 1.000000e+00 : f32
    %45 = vector.broadcast %cst_27 : f32 to vector<4x16xf32>
    %46 = arith.addf %45, %44 : vector<4x16xf32>
    %47 = arith.divf %45, %46 : vector<4x16xf32>
    %48 = vector.extract_strided_slice %39 {offsets = [0, 16], sizes = [8, 16], strides = [1, 1]} : vector<8x32xf32> to vector<8x16xf32>
    %cst_28 = arith.constant dense<0.000000e+00> : vector<4x16xf32>
    %49 = tpu.matmul %2, %48, %cst_28 {dimension_numbers = #tpu.dot_dimension_numbers<[1], [0], [0], [1], [0, 0, 1, 1], [], []>} : vector<4x8xf32>, vector<8x16xf32>, vector<4x16xf32> -> vector<4x16xf32>
    %50 = arith.addf %49, %11 : vector<4x16xf32>
    %51 = arith.negf %50 : vector<4x16xf32>
    %52 = math.exp %51 : vector<4x16xf32>
    %cst_29 = arith.constant 1.000000e+00 : f32
    %53 = vector.broadcast %cst_29 : f32 to vector<4x16xf32>
    %54 = arith.addf %53, %52 : vector<4x16xf32>
    %55 = arith.divf %53, %54 : vector<4x16xf32>
    %cst_30 = arith.constant dense<0.000000e+00> : vector<4x256xf32>
    %56 = tpu.matmul %47, %15, %cst_30 {dimension_numbers = #tpu.dot_dimension_numbers<[1], [0], [0], [1], [0, 0, 1, 1], [], []>} : vector<4x16xf32>, vector<16x256xf32>, vector<4x256xf32> -> vector<4x256xf32>
    %cst_31 = arith.constant dense<0.000000e+00> : vector<4x256xf32>
    %57 = tpu.matmul %55, %17, %cst_31 {dimension_numbers = #tpu.dot_dimension_numbers<[1], [0], [0], [1], [0, 0, 1, 1], [], []>} : vector<4x16xf32>, vector<16x256xf32>, vector<4x256xf32> -> vector<4x256xf32>
    %58 = arith.mulf %56, %57 : vector<4x256xf32>
    %59 = arith.mulf %26, %58 : vector<4x256xf32>
    %60 = arith.index_cast %c0_i32 : i32 to index
    %c0_32 = arith.constant 0 : index
    %c0_33 = arith.constant 0 : index
    %61 = vector.load %arg11[%60, %c0_32, %c0_33] : memref<1x4x256xf32, #tpu.memory_space<vmem>>, vector<1x4x256xf32>
    %62 = vector.shape_cast %61 : vector<1x4x256xf32> to vector<4x256xf32>
    %63 = vector.shape_cast %59 : vector<4x256xf32> to vector<1x4x256xf32>
    tpu.vector_store %arg11[%60, %c0_32, %c0_33], %63 {strides = array<i32>} : memref<1x4x256xf32, #tpu.memory_space<vmem>>, vector<1x4x256xf32>,
    %c1_i32 = arith.constant 1 : i32
    return
  }
  func.func @transform_0(%arg0: i32) -> (i32, i32, i32) {
    %c0_i32 = arith.constant 0 : i32
    %c0_i32_0 = arith.constant 0 : i32
    %c0_i32_1 = arith.constant 0 : i32
    return %arg0, %c0_i32, %c0_i32_0 : i32, i32, i32
  }
  func.func @transform_1(%arg0: i32) -> (i32, i32) {
    %c0_i32 = arith.constant 0 : i32
    %c0_i32_0 = arith.constant 0 : i32
    %c0_i32_1 = arith.constant 0 : i32
    return %c0_i32, %c0_i32_0 : i32, i32
  }
  func.func @transform_2(%arg0: i32) -> (i32, i32) {
    %c0_i32 = arith.constant 0 : i32
    %c0_i32_0 = arith.constant 0 : i32
    %c0_i32_1 = arith.constant 0 : i32
    return %c0_i32, %c0_i32_0 : i32, i32
  }
  func.func @transform_3(%arg0: i32) -> (i32, i32) {
    %c0_i32 = arith.constant 0 : i32
    %c0_i32_0 = arith.constant 0 : i32
    %c0_i32_1 = arith.constant 0 : i32
    return %c0_i32, %c0_i32_0 : i32, i32
  }
  func.func @transform_4(%arg0: i32) -> (i32, i32) {
    %c0_i32 = arith.constant 0 : i32
    %c0_i32_0 = arith.constant 0 : i32
    %c0_i32_1 = arith.constant 0 : i32
    return %c0_i32, %c0_i32_0 : i32, i32
  }
  func.func @transform_5(%arg0: i32) -> (i32, i32) {
    %c0_i32 = arith.constant 0 : i32
    %c0_i32_0 = arith.constant 0 : i32
    %c0_i32_1 = arith.constant 0 : i32
    return %c0_i32, %c0_i32_0 : i32, i32
  }
  func.func @transform_6(%arg0: i32) -> (i32, i32) {
    %c0_i32 = arith.constant 0 : i32
    %c0_i32_0 = arith.constant 0 : i32
    %c0_i32_1 = arith.constant 0 : i32
    return %c0_i32, %c0_i32_0 : i32, i32
  }
  func.func @transform_7(%arg0: i32) -> (i32, i32) {
    %c0_i32 = arith.constant 0 : i32
    %c0_i32_0 = arith.constant 0 : i32
    %c0_i32_1 = arith.constant 0 : i32
    return %c0_i32, %c0_i32_0 : i32, i32
  }
  func.func @transform_8(%arg0: i32) -> (i32, i32) {
    %c0_i32 = arith.constant 0 : i32
    %c0_i32_0 = arith.constant 0 : i32
    %c0_i32_1 = arith.constant 0 : i32
    return %c0_i32, %c0_i32_0 : i32, i32
  }
  func.func @transform_9(%arg0: i32) -> (i32, i32) {
    %c0_i32 = arith.constant 0 : i32
    %c0_i32_0 = arith.constant 0 : i32
    %c0_i32_1 = arith.constant 0 : i32
    return %c0_i32, %c0_i32_0 : i32, i32
  }
  func.func @transform_10(%arg0: i32) -> (i32, i32, i32) {
    %c0_i32 = arith.constant 0 : i32
    %c0_i32_0 = arith.constant 0 : i32
    %c0_i32_1 = arith.constant 0 : i32
    return %arg0, %c0_i32, %c0_i32_0 : i32, i32, i32
  }
}

module attributes {stable_mosaic.version = 11 : i64} {
  func.func @coordatt_kernel(%arg0: i32, %arg1: memref<1x4x256xf32, #tpu.memory_space<vmem>>, %arg2: memref<8x4xf32, #tpu.memory_space<vmem>>, %arg3: memref<8x1xf32, #tpu.memory_space<vmem>>, %arg4: memref<4x8xf32, #tpu.memory_space<vmem>>, %arg5: memref<4x1xf32, #tpu.memory_space<vmem>>, %arg6: memref<4x8xf32, #tpu.memory_space<vmem>>, %arg7: memref<4x1xf32, #tpu.memory_space<vmem>>, %arg8: memref<256x32xbf16, #tpu.memory_space<vmem>>, %arg9: memref<16x256xbf16, #tpu.memory_space<vmem>>, %arg10: memref<16x256xbf16, #tpu.memory_space<vmem>>, %arg11: memref<1x4x256xf32, #tpu.memory_space<vmem>>) attributes {dimension_semantics = [#tpu.dimension_semantics<parallel>], iteration_bounds = array<i64: 2>, scalar_prefetch = 0 : i64, scratch_operands = 0 : i64, tpu.core_type = #tpu.core_type<tc>, window_params = [{transform_indices = @transform_0, window_bounds = array<i64: 1, 4, 256>}, {pipeline_mode = #tpu.pipeline_mode<synchronous>, transform_indices = @transform_1, window_bounds = array<i64: 8, 4>}, {pipeline_mode = #tpu.pipeline_mode<synchronous>, transform_indices = @transform_2, window_bounds = array<i64: 8, 1>}, {pipeline_mode = #tpu.pipeline_mode<synchronous>, transform_indices = @transform_3, window_bounds = array<i64: 4, 8>}, {pipeline_mode = #tpu.pipeline_mode<synchronous>, transform_indices = @transform_4, window_bounds = array<i64: 4, 1>}, {pipeline_mode = #tpu.pipeline_mode<synchronous>, transform_indices = @transform_5, window_bounds = array<i64: 4, 8>}, {pipeline_mode = #tpu.pipeline_mode<synchronous>, transform_indices = @transform_6, window_bounds = array<i64: 4, 1>}, {pipeline_mode = #tpu.pipeline_mode<synchronous>, transform_indices = @transform_7, window_bounds = array<i64: 256, 32>}, {pipeline_mode = #tpu.pipeline_mode<synchronous>, transform_indices = @transform_8, window_bounds = array<i64: 16, 256>}, {pipeline_mode = #tpu.pipeline_mode<synchronous>, transform_indices = @transform_9, window_bounds = array<i64: 16, 256>}, {transform_indices = @transform_10, window_bounds = array<i64: 1, 4, 256>}]} {
    %c0 = arith.constant 0 : index
    %c0_0 = arith.constant 0 : index
    %0 = vector.load %arg2[%c0, %c0_0] : memref<8x4xf32, #tpu.memory_space<vmem>>, vector<8x4xf32>
    %c0_1 = arith.constant 0 : index
    %c0_2 = arith.constant 0 : index
    %1 = vector.load %arg4[%c0_1, %c0_2] : memref<4x8xf32, #tpu.memory_space<vmem>>, vector<4x8xf32>
    %c0_3 = arith.constant 0 : index
    %c0_4 = arith.constant 0 : index
    %2 = vector.load %arg6[%c0_3, %c0_4] : memref<4x8xf32, #tpu.memory_space<vmem>>, vector<4x8xf32>
    %c0_5 = arith.constant 0 : index
    %c0_6 = arith.constant 0 : index
    %3 = vector.load %arg3[%c0_5, %c0_6] : memref<8x1xf32, #tpu.memory_space<vmem>>, vector<8x1xf32>
    %4 = vector.shape_cast %3 : vector<8x1xf32> to vector<8x1xf32>
    %5 = vector.broadcast %4 : vector<8x1xf32> to vector<8x32xf32>
    %c0_7 = arith.constant 0 : index
    %c0_8 = arith.constant 0 : index
    %6 = vector.load %arg5[%c0_7, %c0_8] : memref<4x1xf32, #tpu.memory_space<vmem>>, vector<4x1xf32>
    %7 = vector.shape_cast %6 : vector<4x1xf32> to vector<4x1xf32>
    %8 = vector.broadcast %7 : vector<4x1xf32> to vector<4x16xf32>
    %c0_9 = arith.constant 0 : index
    %c0_10 = arith.constant 0 : index
    %9 = vector.load %arg7[%c0_9, %c0_10] : memref<4x1xf32, #tpu.memory_space<vmem>>, vector<4x1xf32>
    %10 = vector.shape_cast %9 : vector<4x1xf32> to vector<4x1xf32>
    %11 = vector.broadcast %10 : vector<4x1xf32> to vector<4x16xf32>
    %c0_11 = arith.constant 0 : index
    %c0_12 = arith.constant 0 : index
    %12 = vector.load %arg8[%c0_11, %c0_12] : memref<256x32xbf16, #tpu.memory_space<vmem>>, vector<256x32xbf16>
    %13 = arith.extf %12 : vector<256x32xbf16> to vector<256x32xf32>
    %c0_13 = arith.constant 0 : index
    %c0_14 = arith.constant 0 : index
    %14 = vector.load %arg9[%c0_13, %c0_14] : memref<16x256xbf16, #tpu.memory_space<vmem>>, vector<16x256xbf16>
    %15 = arith.extf %14 : vector<16x256xbf16> to vector<16x256xf32>
    %c0_15 = arith.constant 0 : index
    %c0_16 = arith.constant 0 : index
    %16 = vector.load %arg10[%c0_15, %c0_16] : memref<16x256xbf16, #tpu.memory_space<vmem>>, vector<16x256xbf16>
    %17 = arith.extf %16 : vector<16x256xbf16> to vector<16x256xf32>
    %18 = tpu.iota {dimensions = array<i32: 1>} : vector<8x32xi32>
    %c16_i32 = arith.constant 16 : i32
    %19 = vector.broadcast %c16_i32 : i32 to vector<8x32xi32>
    %20 = arith.cmpi slt, %18, %19 : vector<8x32xi32>
    %cst = arith.constant 6.250000e-02 : f32
    %cst_17 = arith.constant 6.250000e-02 : f32
    %21 = vector.broadcast %cst : f32 to vector<8x32xf32>
    %22 = vector.broadcast %cst_17 : f32 to vector<8x32xf32>
    %23 = arith.select %20, %21, %22 : vector<8x32xi1>, vector<8x32xf32>
    %c0_i32 = arith.constant 0 : i32
    %24 = arith.index_cast %c0_i32 : i32 to index
    %c0_18 = arith.constant 0 : index
    %c0_19 = arith.constant 0 : index
    %25 = vector.load %arg1[%24, %c0_18, %c0_19] : memref<1x4x256xf32, #tpu.memory_space<vmem>>, vector<1x4x256xf32>
    %26 = vector.shape_cast %25 : vector<1x4x256xf32> to vector<4x256xf32>
    %cst_20 = arith.constant dense<0.000000e+00> : vector<4x32xf32>
    %27 = tpu.matmul %26, %13, %cst_20 {dimension_numbers = #tpu.dot_dimension_numbers<[1], [0], [0], [1], [0, 0, 1, 1], [], []>} : vector<4x256xf32>, vector<256x32xf32>, vector<4x32xf32> -> vector<4x32xf32>
    %cst_21 = arith.constant dense<0.000000e+00> : vector<8x32xf32>
    %28 = tpu.matmul %0, %27, %cst_21 {dimension_numbers = #tpu.dot_dimension_numbers<[1], [0], [0], [1], [0, 0, 1, 1], [], []>} : vector<8x4xf32>, vector<4x32xf32>, vector<8x32xf32> -> vector<8x32xf32>
    %29 = arith.mulf %28, %23 : vector<8x32xf32>
    %30 = arith.addf %29, %5 : vector<8x32xf32>
    %cst_22 = arith.constant 3.000000e+00 : f32
    %31 = vector.broadcast %cst_22 : f32 to vector<8x32xf32>
    %32 = arith.addf %30, %31 : vector<8x32xf32>
    %cst_23 = arith.constant 0.000000e+00 : f32
    %cst_24 = arith.constant 6.000000e+00 : f32
    %33 = vector.broadcast %cst_23 : f32 to vector<8x32xf32>
    %34 = arith.maximumf %33, %32 : vector<8x32xf32>
    %35 = vector.broadcast %cst_24 : f32 to vector<8x32xf32>
    %36 = arith.minimumf %35, %34 : vector<8x32xf32>
    %cst_25 = arith.constant 0.166666672 : f32
    %37 = vector.broadcast %cst_25 : f32 to vector<8x32xf32>
    %38 = arith.mulf %36, %37 : vector<8x32xf32>
    %39 = arith.mulf %30, %38 : vector<8x32xf32>
    %40 = vector.extract_strided_slice %39 {offsets = [0, 0], sizes = [8, 16], strides = [1, 1]} : vector<8x32xf32> to vector<8x16xf32>
    %cst_26 = arith.constant dense<0.000000e+00> : vector<4x16xf32>
    %41 = tpu.matmul %1, %40, %cst_26 {dimension_numbers = #tpu.dot_dimension_numbers<[1], [0], [0], [1], [0, 0, 1, 1], [], []>} : vector<4x8xf32>, vector<8x16xf32>, vector<4x16xf32> -> vector<4x16xf32>
    %42 = arith.addf %41, %8 : vector<4x16xf32>
    %43 = arith.negf %42 : vector<4x16xf32>
    %44 = math.exp %43 : vector<4x16xf32>
    %cst_27 = arith.constant 1.000000e+00 : f32
    %45 = vector.broadcast %cst_27 : f32 to vector<4x16xf32>
    %46 = arith.addf %45, %44 : vector<4x16xf32>
    %47 = arith.divf %45, %46 : vector<4x16xf32>
    %48 = vector.extract_strided_slice %39 {offsets = [0, 16], sizes = [8, 16], strides = [1, 1]} : vector<8x32xf32> to vector<8x16xf32>
    %cst_28 = arith.constant dense<0.000000e+00> : vector<4x16xf32>
    %49 = tpu.matmul %2, %48, %cst_28 {dimension_numbers = #tpu.dot_dimension_numbers<[1], [0], [0], [1], [0, 0, 1, 1], [], []>} : vector<4x8xf32>, vector<8x16xf32>, vector<4x16xf32> -> vector<4x16xf32>
    %50 = arith.addf %49, %11 : vector<4x16xf32>
    %51 = arith.negf %50 : vector<4x16xf32>
    %52 = math.exp %51 : vector<4x16xf32>
    %cst_29 = arith.constant 1.000000e+00 : f32
    %53 = vector.broadcast %cst_29 : f32 to vector<4x16xf32>
    %54 = arith.addf %53, %52 : vector<4x16xf32>
    %55 = arith.divf %53, %54 : vector<4x16xf32>
    %cst_30 = arith.constant dense<0.000000e+00> : vector<4x256xf32>
    %56 = tpu.matmul %47, %15, %cst_30 {dimension_numbers = #tpu.dot_dimension_numbers<[1], [0], [0], [1], [0, 0, 1, 1], [], []>} : vector<4x16xf32>, vector<16x256xf32>, vector<4x256xf32> -> vector<4x256xf32>
    %cst_31 = arith.constant dense<0.000000e+00> : vector<4x256xf32>
    %57 = tpu.matmul %55, %17, %cst_31 {dimension_numbers = #tpu.dot_dimension_numbers<[1], [0], [0], [1], [0, 0, 1, 1], [], []>} : vector<4x16xf32>, vector<16x256xf32>, vector<4x256xf32> -> vector<4x256xf32>
    %58 = arith.mulf %56, %57 : vector<4x256xf32>
    %59 = arith.mulf %26, %58 : vector<4x256xf32>
    %60 = arith.index_cast %c0_i32 : i32 to index
    %c0_32 = arith.constant 0 : index
    %c0_33 = arith.constant 0 : index
    %61 = vector.load %arg11[%60, %c0_32, %c0_33] : memref<1x4x256xf32, #tpu.memory_space<vmem>>, vector<1x4x256xf32>
    %62 = vector.shape_cast %61 : vector<1x4x256xf32> to vector<4x256xf32>
    %63 = vector.shape_cast %59 : vector<4x256xf32> to vector<1x4x256xf32>
    tpu.vector_store %arg11[%60, %c0_32, %c0_33], %63 {strides = array<i32>} : memref<1x4x256xf32, #tpu.memory_space<vmem>>, vector<1x4x256xf32>,
    %c1_i32 = arith.constant 1 : i32
    return
  }
  func.func @transform_0(%arg0: i32) -> (i32, i32, i32) {
    %c0_i32 = arith.constant 0 : i32
    %c0_i32_0 = arith.constant 0 : i32
    %c0_i32_1 = arith.constant 0 : i32
    return %arg0, %c0_i32, %c0_i32_0 : i32, i32, i32
  }
  func.func @transform_1(%arg0: i32) -> (i32, i32) {
    %c0_i32 = arith.constant 0 : i32
    %c0_i32_0 = arith.constant 0 : i32
    %c0_i32_1 = arith.constant 0 : i32
    return %c0_i32, %c0_i32_0 : i32, i32
  }
  func.func @transform_2(%arg0: i32) -> (i32, i32) {
    %c0_i32 = arith.constant 0 : i32
    %c0_i32_0 = arith.constant 0 : i32
    %c0_i32_1 = arith.constant 0 : i32
    return %c0_i32, %c0_i32_0 : i32, i32
  }
  func.func @transform_3(%arg0: i32) -> (i32, i32) {
    %c0_i32 = arith.constant 0 : i32
    %c0_i32_0 = arith.constant 0 : i32
    %c0_i32_1 = arith.constant 0 : i32
    return %c0_i32, %c0_i32_0 : i32, i32
  }
  func.func @transform_4(%arg0: i32) -> (i32, i32) {
    %c0_i32 = arith.constant 0 : i32
    %c0_i32_0 = arith.constant 0 : i32
    %c0_i32_1 = arith.constant 0 : i32
    return %c0_i32, %c0_i32_0 : i32, i32
  }
  func.func @transform_5(%arg0: i32) -> (i32, i32) {
    %c0_i32 = arith.constant 0 : i32
    %c0_i32_0 = arith.constant 0 : i32
    %c0_i32_1 = arith.constant 0 : i32
    return %c0_i32, %c0_i32_0 : i32, i32
  }
  func.func @transform_6(%arg0: i32) -> (i32, i32) {
    %c0_i32 = arith.constant 0 : i32
    %c0_i32_0 = arith.constant 0 : i32
    %c0_i32_1 = arith.constant 0 : i32
    return %c0_i32, %c0_i32_0 : i32, i32
  }
  func.func @transform_7(%arg0: i32) -> (i32, i32) {
    %c0_i32 = arith.constant 0 : i32
    %c0_i32_0 = arith.constant 0 : i32
    %c0_i32_1 = arith.constant 0 : i32
    return %c0_i32, %c0_i32_0 : i32, i32
  }
  func.func @transform_8(%arg0: i32) -> (i32, i32) {
    %c0_i32 = arith.constant 0 : i32
    %c0_i32_0 = arith.constant 0 : i32
    %c0_i32_1 = arith.constant 0 : i32
    return %c0_i32, %c0_i32_0 : i32, i32
  }
  func.func @transform_9(%arg0: i32) -> (i32, i32) {
    %c0_i32 = arith.constant 0 : i32
    %c0_i32_0 = arith.constant 0 : i32
    %c0_i32_1 = arith.constant 0 : i32
    return %c0_i32, %c0_i32_0 : i32, i32
  }
  func.func @transform_10(%arg0: i32) -> (i32, i32, i32) {
    %c0_i32 = arith.constant 0 : i32
    %c0_i32_0 = arith.constant 0 : i32
    %c0_i32_1 = arith.constant 0 : i32
    return %arg0, %c0_i32, %c0_i32_0 : i32, i32, i32
  }
}

</mosaic_0001>

<llo_original>
// kernel: tpu_custom_call.1
$region0: #{tpu_custom_call.1}
  #allocation0 [shape = 'u32[]', space=smem, size = 0x4, offset = 0x4, fixed_abs, tag = 'smem constant byte address 0x4 - core index']
  #allocation1 [shape = 'u32[144,128]{1,0:T(1,128)}', space=vmem, size = 0x12000, scoped, tag = 'internal scratch']
  %s0 = inlined_call_operand.vmem [shape: f32[2,4,256], index: 0, kind: input, shape index: {}]
  %s1 = inlined_call_operand.vmem [shape: f32[8,4], index: 1, kind: input, shape index: {}]
  %s2 = inlined_call_operand.vmem [shape: f32[8,1], index: 2, kind: input, shape index: {}]
  %s3 = inlined_call_operand.vmem [shape: f32[4,8], index: 3, kind: input, shape index: {}]
  %s4 = inlined_call_operand.vmem [shape: f32[4,1], index: 4, kind: input, shape index: {}]
  %s5 = inlined_call_operand.vmem [shape: f32[4,8], index: 5, kind: input, shape index: {}]
  %s6 = inlined_call_operand.vmem [shape: f32[4,1], index: 6, kind: input, shape index: {}]
  %s7 = inlined_call_operand.vmem [shape: bf16[256,32], index: 7, kind: input, shape index: {}]
  %s8 = inlined_call_operand.vmem [shape: bf16[16,256], index: 8, kind: input, shape index: {}]
  %s9 = inlined_call_operand.vmem [shape: bf16[16,256], index: 9, kind: input, shape index: {}]
  %s10 = inlined_call_operand.hbm [shape: f32[2,4,256], index: 10, kind: output, shape index: {}]
  %s11 = sld [smem:[#allocation0]]
  $region73: #{tpu_custom_call.1} parent=0
    _
  %s13 = ssub.s32 1, %s11
  %s14 = scalar_select 0, %s13, %s11
  $region1: #{tpu_custom_call.1} parent=0
    #allocation2 [shape = 'u8[8192]{0}', space=vmem, size = 0x2000, scoped, tag = 'output window, operand 0']
    #allocation3 [shape = 's32[2]{0}', space=sflag, size = 0x8, scoped, tag = 'scoped memory for tpu_custom_call.1']
    %15 = vsyncpa [#allocation3], 0
    %s16 = scalar_lea.sflag [#allocation3], 1
    %17 = vsyncpa %s16, 0
    loop: start=0, step=1, limit=4
    $region2: #{tpu_custom_call.1} parent=1 // loop_pre_header
      _
    $region3: #{tpu_custom_call.1} parent=1 // loop_header
      %s19 = sphi 0, %s23
      %p20 = scmp.ge.s32.totalorder %s19, 4
      %s29 = sphi 0, %s31
      %s32 = sphi 0, %s29
      %s33 = sphi 0, %s32
      %s49 = sphi 0, %s33
      %s53 = sphi 0, %s53
      %s55 = sphi 0, %s53
      %s56 = sphi 0, %s55
      %s70 = sphi 0, %s56
      %s74 = sphi 0, %s74
      %s76 = sphi 0, %s74
      %s77 = sphi 0, %s76
      %s91 = sphi 0, %s77
      %s95 = sphi 0, %s95
      %s97 = sphi 0, %s95
      %s98 = sphi 0, %s97
      %s112 = sphi 0, %s98
      %s116 = sphi 0, %s116
      %s118 = sphi 0, %s116
      %s119 = sphi 0, %s118
      %s133 = sphi 0, %s119
      %s137 = sphi 0, %s137
      %s139 = sphi 0, %s137
      %s140 = sphi 0, %s139
      %s154 = sphi 0, %s140
      %s158 = sphi 0, %s158
      %s160 = sphi 0, %s158
      %s161 = sphi 0, %s160
      %s175 = sphi 0, %s161
      %s179 = sphi 0, %s179
      %s181 = sphi 0, %s179
      %s182 = sphi 0, %s181
      %s196 = sphi 0, %s182
      %s200 = sphi 0, %s200
      %s202 = sphi 0, %s200
      %s203 = sphi 0, %s202
      %s217 = sphi 0, %s203
      %s221 = sphi 0, %s221
      %s223 = sphi 0, %s221
      %s224 = sphi 0, %s223
      %s238 = sphi 0, %s224
      %s244 = sphi 0, %s246
      %s247 = sphi 0, %s244
      %s248 = sphi 0, %s247
      %s264 = sphi 0, %s248
    $region4: #{tpu_custom_call.1} parent=1 // loop_header_branch
      %22 = sbr.rel (%p20) target = $region8
    $region5: #{tpu_custom_call.1} parent=1 // loop_body
      %s24 = ssub.s32 %s19, 1
      %s25 = ssub.s32 %s19, 2
      %s26 = sadd.s32 %s19, 1
      %s27 = ssub.s32 %s19, %s26
      %p28 = scmp.eq.s32.totalorder %s27, 0
      %s30 = sadd.s32 %s29, 1
      %s31 = scalar_select %p28, %s29, %s30
      %p34 = pneg %p28
      %p35 = scmp.eq.s32.totalorder %s19, 1
      %p36 = por %p34, %p35
      %p37 = scmp.ne.s32.totalorder %s29, %s32
      %p38 = scmp.eq.s32.totalorder %s19, 0
      %p39 = por %p37, %p38
      %p40 = scmp.ne.s32.totalorder %s29, %s32
      %p41 = scmp.eq.s32.totalorder %s24, 1
      %p42 = por %p40, %p41
      %p43 = scmp.ne.s32.totalorder %s32, %s33
      %p44 = scmp.eq.s32.totalorder %s24, 0
      %p45 = por %p43, %p44
      %p46 = scmp.ne.s32.totalorder %s32, %s33
      %p47 = scmp.eq.s32.totalorder %s25, 1
      %p48 = por %p46, %p47
      %p50 = scmp.ne.s32.totalorder %s33, %s49
      %p51 = scmp.eq.s32.totalorder %s25, 0
      %p52 = por %p50, %p51
      %s54 = sadd.s32 %s53, 1
      %p57 = scmp.eq.s32.totalorder %s19, 1
      %p58 = scmp.ne.s32.totalorder %s53, %s55
      %p59 = scmp.eq.s32.totalorder %s19, 0
      %p60 = por %p58, %p59
      %p61 = scmp.ne.s32.totalorder %s53, %s55
      %p62 = scmp.eq.s32.totalorder %s24, 1
      %p63 = por %p61, %p62
      %p64 = scmp.ne.s32.totalorder %s55, %s56
      %p65 = scmp.eq.s32.totalorder %s24, 0
      %p66 = por %p64, %p65
      %p67 = scmp.ne.s32.totalorder %s55, %s56
      %p68 = scmp.eq.s32.totalorder %s25, 1
      %p69 = por %p67, %p68
      %p71 = scmp.ne.s32.totalorder %s56, %s70
      %p72 = scmp.eq.s32.totalorder %s25, 0
      %p73 = por %p71, %p72
      %s75 = sadd.s32 %s74, 1
      %p78 = scmp.eq.s32.totalorder %s19, 1
      %p79 = scmp.ne.s32.totalorder %s74, %s76
      %p80 = scmp.eq.s32.totalorder %s19, 0
      %p81 = por %p79, %p80
      %p82 = scmp.ne.s32.totalorder %s74, %s76
      %p83 = scmp.eq.s32.totalorder %s24, 1
      %p84 = por %p82, %p83
      %p85 = scmp.ne.s32.totalorder %s76, %s77
      %p86 = scmp.eq.s32.totalorder %s24, 0
      %p87 = por %p85, %p86
      %p88 = scmp.ne.s32.totalorder %s76, %s77
      %p89 = scmp.eq.s32.totalorder %s25, 1
      %p90 = por %p88, %p89
      %p92 = scmp.ne.s32.totalorder %s77, %s91
      %p93 = scmp.eq.s32.totalorder %s25, 0
      %p94 = por %p92, %p93
      %s96 = sadd.s32 %s95, 1
      %p99 = scmp.eq.s32.totalorder %s19, 1
      %p100 = scmp.ne.s32.totalorder %s95, %s97
      %p101 = scmp.eq.s32.totalorder %s19, 0
      %p102 = por %p100, %p101
      %p103 = scmp.ne.s32.totalorder %s95, %s97
      %p104 = scmp.eq.s32.totalorder %s24, 1
      %p105 = por %p103, %p104
      %p106 = scmp.ne.s32.totalorder %s97, %s98
      %p107 = scmp.eq.s32.totalorder %s24, 0
      %p108 = por %p106, %p107
      %p109 = scmp.ne.s32.totalorder %s97, %s98
      %p110 = scmp.eq.s32.totalorder %s25, 1
      %p111 = por %p109, %p110
      %p113 = scmp.ne.s32.totalorder %s98, %s112
      %p114 = scmp.eq.s32.totalorder %s25, 0
      %p115 = por %p113, %p114
      %s117 = sadd.s32 %s116, 1
      %p120 = scmp.eq.s32.totalorder %s19, 1
      %p121 = scmp.ne.s32.totalorder %s116, %s118
      %p122 = scmp.eq.s32.totalorder %s19, 0
      %p123 = por %p121, %p122
      %p124 = scmp.ne.s32.totalorder %s116, %s118
      %p125 = scmp.eq.s32.totalorder %s24, 1
      %p126 = por %p124, %p125
      %p127 = scmp.ne.s32.totalorder %s118, %s119
      %p128 = scmp.eq.s32.totalorder %s24, 0
      %p129 = por %p127, %p128
      %p130 = scmp.ne.s32.totalorder %s118, %s119
      %p131 = scmp.eq.s32.totalorder %s25, 1
      %p132 = por %p130, %p131
      %p134 = scmp.ne.s32.totalorder %s119, %s133
      %p135 = scmp.eq.s32.totalorder %s25, 0
      %p136 = por %p134, %p135
      %s138 = sadd.s32 %s137, 1
      %p141 = scmp.eq.s32.totalorder %s19, 1
      %p142 = scmp.ne.s32.totalorder %s137, %s139
      %p143 = scmp.eq.s32.totalorder %s19, 0
      %p144 = por %p142, %p143
      %p145 = scmp.ne.s32.totalorder %s137, %s139
      %p146 = scmp.eq.s32.totalorder %s24, 1
      %p147 = por %p145, %p146
      %p148 = scmp.ne.s32.totalorder %s139, %s140
      %p149 = scmp.eq.s32.totalorder %s24, 0
      %p150 = por %p148, %p149
      %p151 = scmp.ne.s32.totalorder %s139, %s140
      %p152 = scmp.eq.s32.totalorder %s25, 1
      %p153 = por %p151, %p152
      %p155 = scmp.ne.s32.totalorder %s140, %s154
      %p156 = scmp.eq.s32.totalorder %s25, 0
      %p157 = por %p155, %p156
      %s159 = sadd.s32 %s158, 1
      %p162 = scmp.eq.s32.totalorder %s19, 1
      %p163 = scmp.ne.s32.totalorder %s158, %s160
      %p164 = scmp.eq.s32.totalorder %s19, 0
      %p165 = por %p163, %p164
      %p166 = scmp.ne.s32.totalorder %s158, %s160
      %p167 = scmp.eq.s32.totalorder %s24, 1
      %p168 = por %p166, %p167
      %p169 = scmp.ne.s32.totalorder %s160, %s161
      %p170 = scmp.eq.s32.totalorder %s24, 0
      %p171 = por %p169, %p170
      %p172 = scmp.ne.s32.totalorder %s160, %s161
      %p173 = scmp.eq.s32.totalorder %s25, 1
      %p174 = por %p172, %p173
      %p176 = scmp.ne.s32.totalorder %s161, %s175
      %p177 = scmp.eq.s32.totalorder %s25, 0
      %p178 = por %p176, %p177
      %s180 = sadd.s32 %s179, 1
      %p183 = scmp.eq.s32.totalorder %s19, 1
      %p184 = scmp.ne.s32.totalorder %s179, %s181
      %p185 = scmp.eq.s32.totalorder %s19, 0
      %p186 = por %p184, %p185
      %p187 = scmp.ne.s32.totalorder %s179, %s181
      %p188 = scmp.eq.s32.totalorder %s24, 1
      %p189 = por %p187, %p188
      %p190 = scmp.ne.s32.totalorder %s181, %s182
      %p191 = scmp.eq.s32.totalorder %s24, 0
      %p192 = por %p190, %p191
      %p193 = scmp.ne.s32.totalorder %s181, %s182
      %p194 = scmp.eq.s32.totalorder %s25, 1
      %p195 = por %p193, %p194
      %p197 = scmp.ne.s32.totalorder %s182, %s196
      %p198 = scmp.eq.s32.totalorder %s25, 0
      %p199 = por %p197, %p198
      %s201 = sadd.s32 %s200, 1
      %p204 = scmp.eq.s32.totalorder %s19, 1
      %p205 = scmp.ne.s32.totalorder %s200, %s202
      %p206 = scmp.eq.s32.totalorder %s19, 0
      %p207 = por %p205, %p206
      %p208 = scmp.ne.s32.totalorder %s200, %s202
      %p209 = scmp.eq.s32.totalorder %s24, 1
      %p210 = por %p208, %p209
      %p211 = scmp.ne.s32.totalorder %s202, %s203
      %p212 = scmp.eq.s32.totalorder %s24, 0
      %p213 = por %p211, %p212
      %p214 = scmp.ne.s32.totalorder %s202, %s203
      %p215 = scmp.eq.s32.totalorder %s25, 1
      %p216 = por %p214, %p215
      %p218 = scmp.ne.s32.totalorder %s203, %s217
      %p219 = scmp.eq.s32.totalorder %s25, 0
      %p220 = por %p218, %p219
      %s222 = sadd.s32 %s221, 1
      %p225 = scmp.eq.s32.totalorder %s19, 1
      %p226 = scmp.ne.s32.totalorder %s221, %s223
      %p227 = scmp.eq.s32.totalorder %s19, 0
      %p228 = por %p226, %p227
      %p229 = scmp.ne.s32.totalorder %s221, %s223
      %p230 = scmp.eq.s32.totalorder %s24, 1
      %p231 = por %p229, %p230
      %p232 = scmp.ne.s32.totalorder %s223, %s224
      %p233 = scmp.eq.s32.totalorder %s24, 0
      %p234 = por %p232, %p233
      %p235 = scmp.ne.s32.totalorder %s223, %s224
      %p236 = scmp.eq.s32.totalorder %s25, 1
      %p237 = por %p235, %p236
      %p239 = scmp.ne.s32.totalorder %s224, %s238
      %p240 = scmp.eq.s32.totalorder %s25, 0
      %p241 = por %p239, %p240
      %s242 = ssub.s32 %s19, %s26
      %p243 = scmp.eq.s32.totalorder %s242, 0
      %s245 = sadd.s32 %s244, 1
      %s246 = scalar_select %p243, %s244, %s245
      %p249 = pneg %p243
      %p250 = scmp.eq.s32.totalorder %s19, 1
      %p251 = por %p249, %p250
      %p252 = scmp.ne.s32.totalorder %s244, %s247
      %p253 = scmp.eq.s32.totalorder %s19, 0
      %p254 = por %p252, %p253
      %p255 = scmp.ne.s32.totalorder %s244, %s247
      %p256 = scmp.eq.s32.totalorder %s24, 1
      %p257 = por %p255, %p256
      %p258 = scmp.ne.s32.totalorder %s247, %s248
      %p259 = scmp.eq.s32.totalorder %s24, 0
      %p260 = por %p258, %p259
      %p261 = scmp.ne.s32.totalorder %s247, %s248
      %p262 = scmp.eq.s32.totalorder %s25, 1
      %p263 = por %p261, %p262
      %p265 = scmp.ne.s32.totalorder %s248, %s264
      %p266 = scmp.eq.s32.totalorder %s25, 0
      %p267 = por %p265, %p266
      %p268 = scmp.le.s32.totalorder 1, %s19
      %p269 = scmp.lt.s32.totalorder %s19, 3
      %p270 = pnand %p268, %p269
      %p271 = pneg %p270
      // Predicated region
      $region9: #{tpu_custom_call.1} parent=5 // pred_check
        _
      $region10: #{tpu_custom_call.1} parent=5 // pred_check_branch
        %273 = sbr.rel (%p270) target = $region12
      $region11: #{tpu_custom_call.1} parent=5 // pred_region
        %s274 = ssub.s32 %s19, 1
        // Predicated region
        $region13: #{tpu_custom_call.1} parent=11 // pred_check
          %p275 = pneg %p66
        $region14: #{tpu_custom_call.1} parent=11 // pred_check_branch
          %277 = sbr.rel (%p275) target = $region16
        $region15: #{tpu_custom_call.1} parent=11 // pred_region
          _
        $region16: #{tpu_custom_call.1} parent=11 // pred_fallthru
          _
        // Predicated region
        $region17: #{tpu_custom_call.1} parent=11 // pred_check
          %p278 = pneg %p87
        $region18: #{tpu_custom_call.1} parent=11 // pred_check_branch
          %280 = sbr.rel (%p278) target = $region20
        $region19: #{tpu_custom_call.1} parent=11 // pred_region
          _
        $region20: #{tpu_custom_call.1} parent=11 // pred_fallthru
          _
        // Predicated region
        $region21: #{tpu_custom_call.1} parent=11 // pred_check
          %p281 = pneg %p108
        $region22: #{tpu_custom_call.1} parent=11 // pred_check_branch
          %283 = sbr.rel (%p281) target = $region24
        $region23: #{tpu_custom_call.1} parent=11 // pred_region
          _
        $region24: #{tpu_custom_call.1} parent=11 // pred_fallthru
          _
        // Predicated region
        $region25: #{tpu_custom_call.1} parent=11 // pred_check
          %p284 = pneg %p129
        $region26: #{tpu_custom_call.1} parent=11 // pred_check_branch
          %286 = sbr.rel (%p284) target = $region28
        $region27: #{tpu_custom_call.1} parent=11 // pred_region
          _
        $region28: #{tpu_custom_call.1} parent=11 // pred_fallthru
          _
        // Predicated region
        $region29: #{tpu_custom_call.1} parent=11 // pred_check
          %p287 = pneg %p150
        $region30: #{tpu_custom_call.1} parent=11 // pred_check_branch
          %289 = sbr.rel (%p287) target = $region32
        $region31: #{tpu_custom_call.1} parent=11 // pred_region
          _
        $region32: #{tpu_custom_call.1} parent=11 // pred_fallthru
          _
        // Predicated region
        $region33: #{tpu_custom_call.1} parent=11 // pred_check
          %p290 = pneg %p171
        $region34: #{tpu_custom_call.1} parent=11 // pred_check_branch
          %292 = sbr.rel (%p290) target = $region36
        $region35: #{tpu_custom_call.1} parent=11 // pred_region
          _
        $region36: #{tpu_custom_call.1} parent=11 // pred_fallthru
          _
        // Predicated region
        $region37: #{tpu_custom_call.1} parent=11 // pred_check
          %p293 = pneg %p192
        $region38: #{tpu_custom_call.1} parent=11 // pred_check_branch
          %295 = sbr.rel (%p293) target = $region40
        $region39: #{tpu_custom_call.1} parent=11 // pred_region
          _
        $region40: #{tpu_custom_call.1} parent=11 // pred_fallthru
          _
        // Predicated region
        $region41: #{tpu_custom_call.1} parent=11 // pred_check
          %p296 = pneg %p213
        $region42: #{tpu_custom_call.1} parent=11 // pred_check_branch
          %298 = sbr.rel (%p296) target = $region44
        $region43: #{tpu_custom_call.1} parent=11 // pred_region
          _
        $region44: #{tpu_custom_call.1} parent=11 // pred_fallthru
          _
        // Predicated region
        $region45: #{tpu_custom_call.1} parent=11 // pred_check
          %p299 = pneg %p234
        $region46: #{tpu_custom_call.1} parent=11 // pred_check_branch
          %301 = sbr.rel (%p299) target = $region48
        $region47: #{tpu_custom_call.1} parent=11 // pred_region
          _
        $region48: #{tpu_custom_call.1} parent=11 // pred_fallthru
          _
      $region12: #{tpu_custom_call.1} parent=5 // pred_fallthru
        _
      %p302 = scmp.lt.s32.totalorder %s19, 2
      // Predicated region
      $region49: #{tpu_custom_call.1} parent=5 // pred_check
        %p303 = pneg %p302
      $region50: #{tpu_custom_call.1} parent=5 // pred_check_branch
        %305 = sbr.rel (%p303) target = $region52
      $region51: #{tpu_custom_call.1} parent=5 // pred_region
        // Predicated region
        $region53: #{tpu_custom_call.1} parent=51 // pred_check
          %p306 = pneg %p39
        $region54: #{tpu_custom_call.1} parent=51 // pred_check_branch
          %308 = sbr.rel (%p306) target = $region56
        $region55: #{tpu_custom_call.1} parent=51 // pred_region
          %p309 = scmp.lt.s32.totalorder %s19, 1
          %s310 = scalar_select %p309, %s19, 1
          %s311 = smul.addr %s310, 2
          %s312 = smul.addr %s311, 4
          %s313 = scalar_lea.vmem %s0, %s312
        $region56: #{tpu_custom_call.1} parent=51 // pred_fallthru
          _
      $region52: #{tpu_custom_call.1} parent=5 // pred_fallthru
        _
      %p314 = scmp.le.s32.totalorder 1, %s19
      %p315 = scmp.lt.s32.totalorder %s19, 3
      %p316 = pnand %p314, %p315
      %p317 = pneg %p316
      // Predicated region
      $region57: #{tpu_custom_call.1} parent=5 // pred_check
        _
      $region58: #{tpu_custom_call.1} parent=5 // pred_check_branch
        %319 = sbr.rel (%p316) target = $region60
      $region59: #{tpu_custom_call.1} parent=5 // pred_region
        %s320 = ssub.s32 %s19, 1
        %p321 = scmp.lt.s32.totalorder %s24, 1
        %s322 = scalar_select %p321, %s24, 1
        %s323 = smul.addr %s322, 2
        %s324 = smul.addr %s323, 4
        %s325 = scalar_lea.vmem %s0, %s324
        %p326 = pneg %p45
        %p327 = pneg %p42
        %p328 = pneg %p66
        %p329 = pneg %p63
        %p330 = pneg %p87
        %p331 = pneg %p84
        %p332 = pneg %p108
        %p333 = pneg %p105
        %p334 = pneg %p129
        %p335 = pneg %p126
        %p336 = pneg %p150
        %p337 = pneg %p147
        %p338 = pneg %p171
        %p339 = pneg %p168
        %p340 = pneg %p192
        %p341 = pneg %p189
        %p342 = pneg %p213
        %p343 = pneg %p210
        %p344 = pneg %p234
        %p345 = pneg %p231
        %p346 = pneg %p260
        %p347 = pneg %p257
        %s348 = sand.u32 %s247, 1
        %s349 = scalar_lea.sflag [#allocation3], %s348
        %s350 = sand.u32 %s247, 1
        %s351 = smul.addr %s350, 8
        %s352 = scalar_lea.vmem [#allocation2], %s351
        %p353 = scmp.lt.s32.totalorder %s24, 1
        %s354 = scalar_select %p353, %s24, 1
        %s355 = smul.addr %s354, 2
        %s356 = smul.addr %s355, 4
        %s357 = scalar_lea.vmem %s0, %s356
        %v358 = vld [vmem:[%s1] sm:$0xff]
        %v359 = vld [vmem:[%s3] sm:$0xf]
        %v360 = vld [vmem:[%s5] sm:$0xf]
        %v361 = vld [vmem:[%s2] sm:$0xff]
        %363 = vset.pattern.permute.xlu0 0
        %364 = vperm.xlu0 %363, %v361
        %v365 = vpop.permute.xlu0 %364
        %v367 = vld [vmem:[%s4] sm:$0xf]
        %369 = vset.pattern.permute.xlu0 0
        %370 = vperm.xlu0 %369, %v367
        %v371 = vpop.permute.xlu0 %370
        %v373 = vld [vmem:[%s6] sm:$0xf]
        %375 = vset.pattern.permute.xlu0 0
        %376 = vperm.xlu0 %375, %v373
        %v377 = vpop.permute.xlu0 %376
        %v379 = vld [vmem:[%s7] sm:$0xf]
        %v380 = vld [vmem:[%s7 + $0x4] sm:$0xf]
        %v381 = vld [vmem:[%s7 + $0x8] sm:$0xf]
        %v382 = vld [vmem:[%s7 + $0xc] sm:$0xf]
        %v383 = vld [vmem:[%s7 + $0x10] sm:$0xf]
        %v384 = vld [vmem:[%s7 + $0x14] sm:$0xf]
        %v385 = vld [vmem:[%s7 + $0x18] sm:$0xf]
        %v386 = vld [vmem:[%s7 + $0x1c] sm:$0xf]
        %v387 = vld [vmem:[%s7 + $0x20] sm:$0xf]
        %v388 = vld [vmem:[%s7 + $0x24] sm:$0xf]
        %v389 = vld [vmem:[%s7 + $0x28] sm:$0xf]
        %v390 = vld [vmem:[%s7 + $0x2c] sm:$0xf]
        %v391 = vld [vmem:[%s7 + $0x30] sm:$0xf]
        %v392 = vld [vmem:[%s7 + $0x34] sm:$0xf]
        %v393 = vld [vmem:[%s7 + $0x38] sm:$0xf]
        %v394 = vld [vmem:[%s7 + $0x3c] sm:$0xf]
        %v395 = vld [vmem:[%s7 + $0x40] sm:$0xf]
        %v396 = vld [vmem:[%s7 + $0x44] sm:$0xf]
        %v397 = vld [vmem:[%s7 + $0x48] sm:$0xf]
        %v398 = vld [vmem:[%s7 + $0x4c] sm:$0xf]
        %v399 = vld [vmem:[%s7 + $0x50] sm:$0xf]
        %v400 = vld [vmem:[%s7 + $0x54] sm:$0xf]
        %v401 = vld [vmem:[%s7 + $0x58] sm:$0xf]
        %v402 = vld [vmem:[%s7 + $0x5c] sm:$0xf]
        %v403 = vld [vmem:[%s7 + $0x60] sm:$0xf]
        %v404 = vld [vmem:[%s7 + $0x64] sm:$0xf]
        %v405 = vld [vmem:[%s7 + $0x68] sm:$0xf]
        %v406 = vld [vmem:[%s7 + $0x6c] sm:$0xf]
        %v407 = vld [vmem:[%s7 + $0x70] sm:$0xf]
        %v408 = vld [vmem:[%s7 + $0x74] sm:$0xf]
        %v409 = vld [vmem:[%s7 + $0x78] sm:$0xf]
        %v410 = vld [vmem:[%s7 + $0x7c] sm:$0xf]
        %v411 = vunpack.c.l.bf16 %v379
        %v412 = vunpack.c.l.bf16 %v380
        %v413 = vunpack.c.l.bf16 %v381
        %v414 = vunpack.c.l.bf16 %v382
        %v415 = vunpack.c.l.bf16 %v383
        %v416 = vunpack.c.l.bf16 %v384
        %v417 = vunpack.c.l.bf16 %v385
        %v418 = vunpack.c.l.bf16 %v386
        %v419 = vunpack.c.l.bf16 %v387
        %v420 = vunpack.c.l.bf16 %v388
        %v421 = vunpack.c.l.bf16 %v389
        %v422 = vunpack.c.l.bf16 %v390
        %v423 = vunpack.c.l.bf16 %v391
        %v424 = vunpack.c.l.bf16 %v392
        %v425 = vunpack.c.l.bf16 %v393
        %v426 = vunpack.c.l.bf16 %v394
        %v427 = vunpack.c.l.bf16 %v395
        %v428 = vunpack.c.l.bf16 %v396
        %v429 = vunpack.c.l.bf16 %v397
        %v430 = vunpack.c.l.bf16 %v398
        %v431 = vunpack.c.l.bf16 %v399
        %v432 = vunpack.c.l.bf16 %v400
        %v433 = vunpack.c.l.bf16 %v401
        %v434 = vunpack.c.l.bf16 %v402
        %v435 = vunpack.c.l.bf16 %v403
        %v436 = vunpack.c.l.bf16 %v404
        %v437 = vunpack.c.l.bf16 %v405
        %v438 = vunpack.c.l.bf16 %v406
        %v439 = vunpack.c.l.bf16 %v407
        %v440 = vunpack.c.l.bf16 %v408
        %v441 = vunpack.c.l.bf16 %v409
        %v442 = vunpack.c.l.bf16 %v410
        %v443 = vld [vmem:[%s8] sm:$0xff]
        %v444 = vld [vmem:[%s8 + $0x8] sm:$0xff]
        %v445 = vunpack.c.l.bf16 %v443
        %v446 = vunpack.c.h.bf16 %v443
        %v447 = vunpack.c.l.bf16 %v444
        %v448 = vunpack.c.h.bf16 %v444
        %v449 = vld [vmem:[%s9] sm:$0xff]
        %v450 = vld [vmem:[%s9 + $0x8] sm:$0xff]
        %v451 = vunpack.c.l.bf16 %v449
        %v452 = vunpack.c.h.bf16 %v449
        %v453 = vunpack.c.l.bf16 %v450
        %v454 = vunpack.c.h.bf16 %v450
        %v455 = vld [vmem:[%s357] sm:$0xff]
        %v457 = vcombine.high %v455, %v455
        %459 = vmatprep.subr.mxu0 0.0
        %460 = vmatpush1.msra.mxu0 %v411
        %461 = vmatprep.subr.mxu0 0.0
        %462 = vmatpush1.msra.mxu0 %v412
        %463 = vmatprep.subr.mxu0 0.0
        %464 = vmatpush1.msra.mxu0 %v413
        %465 = vmatprep.subr.mxu0 0.0
        %466 = vmatpush1.msra.mxu0 %v414
        %467 = vmatprep.subr.mxu0 0.0
        %468 = vmatpush1.msra.mxu0 %v415
        %469 = vmatprep.subr.mxu0 0.0
        %470 = vmatpush1.msra.mxu0 %v416
        %471 = vmatprep.subr.mxu0 0.0
        %472 = vmatpush1.msra.mxu0 %v417
        %473 = vmatprep.subr.mxu0 0.0
        %474 = vmatpush1.msra.mxu0 %v418
        %475 = vmatprep.subr.mxu0 0.0
        %476 = vmatpush1.msra.mxu0 %v419
        %477 = vmatprep.subr.mxu0 0.0
        %478 = vmatpush1.msra.mxu0 %v420
        %479 = vmatprep.subr.mxu0 0.0
        %480 = vmatpush1.msra.mxu0 %v421
        %481 = vmatprep.subr.mxu0 0.0
        %482 = vmatpush1.msra.mxu0 %v422
        %483 = vmatprep.subr.mxu0 0.0
        %484 = vmatpush1.msra.mxu0 %v423
        %485 = vmatprep.subr.mxu0 0.0
        %486 = vmatpush1.msra.mxu0 %v424
        %487 = vmatprep.subr.mxu0 0.0
        %488 = vmatpush1.msra.mxu0 %v425
        %489 = vmatprep.subr.mxu0 0.0
        %490 = vmatpush1.msra.mxu0 %v426
        %491 = vmatprep.subr.mxu0 0.0
        %492 = vmatpush1.msra.mxu0 %v427
        %493 = vmatprep.subr.mxu0 0.0
        %494 = vmatpush1.msra.mxu0 %v428
        %495 = vmatprep.subr.mxu0 0.0
        %496 = vmatpush1.msra.mxu0 %v429
        %497 = vmatprep.subr.mxu0 0.0
        %498 = vmatpush1.msra.mxu0 %v430
        %499 = vmatprep.subr.mxu0 0.0
        %500 = vmatpush1.msra.mxu0 %v431
        %501 = vmatprep.subr.mxu0 0.0
        %502 = vmatpush1.msra.mxu0 %v432
        %503 = vmatprep.subr.mxu0 0.0
        %504 = vmatpush1.msra.mxu0 %v433
        %505 = vmatprep.subr.mxu0 0.0
        %506 = vmatpush1.msra.mxu0 %v434
        %507 = vmatprep.subr.mxu0 0.0
        %508 = vmatpush1.msra.mxu0 %v435
        %509 = vmatprep.subr.mxu0 0.0
        %510 = vmatpush1.msra.mxu0 %v436
        %511 = vmatprep.subr.mxu0 0.0
        %512 = vmatpush1.msra.mxu0 %v437
        %513 = vmatprep.subr.mxu0 0.0
        %514 = vmatpush1.msra.mxu0 %v438
        %515 = vmatprep.subr.mxu0 0.0
        %516 = vmatpush1.msra.mxu0 %v439
        %517 = vmatprep.subr.mxu0 0.0
        %518 = vmatpush1.msra.mxu0 %v440
        %519 = vmatprep.subr.mxu0 0.0
        %520 = vmatpush1.msra.mxu0 %v441
        %521 = vmatprep.subr.mxu0 0.0
        %522 = vmatpush1.msra.mxu0 %v442
        %523 = vmatprep.mubr.f32.mxu0 %v457
        %524 = vmatmul.mubr.f32.gmra.mrb[0].mxu0 %v455
        %v525 = vpop.f32.mrb[0].mxu0
        %v526 = vadd.f32 0.0, %v525
        %v527 = vpop.f32.mrb[0].mxu0
        %528 = vdwg.mxu0
        %vm529 = vcmask 31744
        %v531 = vsel %vm529, %v358, 0
        %vm533 = vcmask 1043456
        %v535 = vsel %vm533, %v526, 0
        %537 = vmatprep.subr.mxu0 0.0
        %538 = vmatpush1.msra.mxu0 %v535
        %539 = vmatprep.subr.mxu0 0.0
        %540 = vmatpush1.msra.mxu0 0.0
        %541 = vmatprep.subr.mxu0 0.0
        %542 = vmatpush1.msra.mxu0 0.0
        %543 = vmatprep.subr.mxu0 0.0
        %544 = vmatpush1.msra.mxu0 0.0
        %545 = vmatprep.subr.mxu0 0.0
        %546 = vmatpush1.msra.mxu0 0.0
        %547 = vmatprep.subr.mxu0 0.0
        %548 = vmatpush1.msra.mxu0 0.0
        %549 = vmatprep.subr.mxu0 0.0
        %550 = vmatpush1.msra.mxu0 0.0
        %551 = vmatprep.subr.mxu0 0.0
        %552 = vmatpush1.msra.mxu0 0.0
        %553 = vmatprep.subr.mxu0 0.0
        %554 = vmatpush1.msra.mxu0 0.0
        %555 = vmatprep.subr.mxu0 0.0
        %556 = vmatpush1.msra.mxu0 0.0
        %557 = vmatprep.subr.mxu0 0.0
        %558 = vmatpush1.msra.mxu0 0.0
        %559 = vmatprep.subr.mxu0 0.0
        %560 = vmatpush1.msra.mxu0 0.0
        %561 = vmatprep.subr.mxu0 0.0
        %562 = vmatpush1.msra.mxu0 0.0
        %563 = vmatprep.subr.mxu0 0.0
        %564 = vmatpush1.msra.mxu0 0.0
        %565 = vmatprep.subr.mxu0 0.0
        %566 = vmatpush1.msra.mxu0 0.0
        %567 = vmatprep.subr.mxu0 0.0
        %568 = vmatpush1.msra.mxu0 0.0
        %569 = vmatprep.subr.mxu0 0.0
        %570 = vmatpush1.msra.mxu0 0.0
        %571 = vmatprep.subr.mxu0 0.0
        %572 = vmatpush1.msra.mxu0 0.0
        %573 = vmatprep.subr.mxu0 0.0
        %574 = vmatpush1.msra.mxu0 0.0
        %575 = vmatprep.subr.mxu0 0.0
        %576 = vmatpush1.msra.mxu0 0.0
        %577 = vmatprep.subr.mxu0 0.0
        %578 = vmatpush1.msra.mxu0 0.0
        %579 = vmatprep.subr.mxu0 0.0
        %580 = vmatpush1.msra.mxu0 0.0
        %581 = vmatprep.subr.mxu0 0.0
        %582 = vmatpush1.msra.mxu0 0.0
        %583 = vmatprep.subr.mxu0 0.0
        %584 = vmatpush1.msra.mxu0 0.0
        %585 = vmatprep.subr.mxu0 0.0
        %586 = vmatpush1.msra.mxu0 0.0
        %587 = vmatprep.subr.mxu0 0.0
        %588 = vmatpush1.msra.mxu0 0.0
        %589 = vmatprep.subr.mxu0 0.0
        %590 = vmatpush1.msra.mxu0 0.0
        %591 = vmatprep.subr.mxu0 0.0
        %592 = vmatpush1.msra.mxu0 0.0
        %593 = vmatprep.subr.mxu0 0.0
        %594 = vmatpush1.msra.mxu0 0.0
        %595 = vmatprep.subr.mxu0 0.0
        %596 = vmatpush1.msra.mxu0 0.0
        %597 = vmatprep.subr.mxu0 0.0
        %598 = vmatpush1.msra.mxu0 0.0
        %599 = vmatprep.subr.mxu0 0.0
        %600 = vmatpush1.msra.mxu0 0.0
        %601 = vmatprep.mubr.f32.mxu0 0.0
        %602 = vmatmul.mubr.f32.gmra.mrb[0].mxu0 %v531
        %v603 = vpop.f32.mrb[0].mxu0
        %v604 = vadd.f32 0.0, %v603
        %v605 = vpop.f32.mrb[0].mxu0
        %606 = vdwg.mxu0
        %v607 = vmul.f32 %v604, 0.0625
        %v608 = vadd.f32 %v607, %v365
        %v609 = vadd.f32 %v608, 3.0
        %v610 = vmax.f32 %v609, 0.0
        %v611 = vmin.f32 %v610, 6.0
        %v612 = vmul.f32 %v611, 0.16666667
        %v613 = vmul.f32 %v608, %v612
        %vm614 = vcmask 64512
        %v616 = vsel %vm614, %v359, 0
        %618 = vmatprep.subr.mxu0 0.0
        %619 = vmatpush1.msra.mxu0 %v613
        %620 = vmatprep.subr.mxu0 0.0
        %621 = vmatpush1.msra.mxu0 0.0
        %622 = vmatprep.subr.mxu0 0.0
        %623 = vmatpush1.msra.mxu0 0.0
        %624 = vmatprep.subr.mxu0 0.0
        %625 = vmatpush1.msra.mxu0 0.0
        %626 = vmatprep.subr.mxu0 0.0
        %627 = vmatpush1.msra.mxu0 0.0
        %628 = vmatprep.subr.mxu0 0.0
        %629 = vmatpush1.msra.mxu0 0.0
        %630 = vmatprep.subr.mxu0 0.0
        %631 = vmatpush1.msra.mxu0 0.0
        %632 = vmatprep.subr.mxu0 0.0
        %633 = vmatpush1.msra.mxu0 0.0
        %634 = vmatprep.subr.mxu0 0.0
        %635 = vmatpush1.msra.mxu0 0.0
        %636 = vmatprep.subr.mxu0 0.0
        %637 = vmatpush1.msra.mxu0 0.0
        %638 = vmatprep.subr.mxu0 0.0
        %639 = vmatpush1.msra.mxu0 0.0
        %640 = vmatprep.subr.mxu0 0.0
        %641 = vmatpush1.msra.mxu0 0.0
        %642 = vmatprep.subr.mxu0 0.0
        %643 = vmatpush1.msra.mxu0 0.0
        %644 = vmatprep.subr.mxu0 0.0
        %645 = vmatpush1.msra.mxu0 0.0
        %646 = vmatprep.subr.mxu0 0.0
        %647 = vmatpush1.msra.mxu0 0.0
        %648 = vmatprep.subr.mxu0 0.0
        %649 = vmatpush1.msra.mxu0 0.0
        %650 = vmatprep.subr.mxu0 0.0
        %651 = vmatpush1.msra.mxu0 0.0
        %652 = vmatprep.subr.mxu0 0.0
        %653 = vmatpush1.msra.mxu0 0.0
        %654 = vmatprep.subr.mxu0 0.0
        %655 = vmatpush1.msra.mxu0 0.0
        %656 = vmatprep.subr.mxu0 0.0
        %657 = vmatpush1.msra.mxu0 0.0
        %658 = vmatprep.subr.mxu0 0.0
        %659 = vmatpush1.msra.mxu0 0.0
        %660 = vmatprep.subr.mxu0 0.0
        %661 = vmatpush1.msra.mxu0 0.0
        %662 = vmatprep.subr.mxu0 0.0
        %663 = vmatpush1.msra.mxu0 0.0
        %664 = vmatprep.subr.mxu0 0.0
        %665 = vmatpush1.msra.mxu0 0.0
        %666 = vmatprep.subr.mxu0 0.0
        %667 = vmatpush1.msra.mxu0 0.0
        %668 = vmatprep.subr.mxu0 0.0
        %669 = vmatpush1.msra.mxu0 0.0
        %670 = vmatprep.subr.mxu0 0.0
        %671 = vmatpush1.msra.mxu0 0.0
        %672 = vmatprep.subr.mxu0 0.0
        %673 = vmatpush1.msra.mxu0 0.0
        %674 = vmatprep.subr.mxu0 0.0
        %675 = vmatpush1.msra.mxu0 0.0
        %676 = vmatprep.subr.mxu0 0.0
        %677 = vmatpush1.msra.mxu0 0.0
        %678 = vmatprep.subr.mxu0 0.0
        %679 = vmatpush1.msra.mxu0 0.0
        %680 = vmatprep.subr.mxu0 0.0
        %681 = vmatpush1.msra.mxu0 0.0
        %682 = vmatprep.mubr.f32.mxu0 0.0
        %683 = vmatmul.mubr.f32.gmra.mrb[0].mxu0 %v616
        %v684 = vpop.f32.mrb[0].mxu0
        %v685 = vadd.f32 %v371, %v684
        %v686 = vpop.f32.mrb[0].mxu0
        %687 = vdwg.mxu0
        %v688 = vxor.u32 %v685, 2147483648
        %v689 = vmul.f32 %v688, 1.442695
        %v690 = vpow.pop %v689
        %v691 = vadd.f32 %v690, 1.0
        %v692 = vrcp.pop %v691
        %v693 = vmul.f32 1.0, %v692
        %695 = vrot.lane.b32.xlu0 %v613, 112
        %v696 = vpop.permute.xlu0 %695
        %v699 = vsel %vm614, %v360, 0
        %701 = vmatprep.subr.mxu0 0.0
        %702 = vmatpush1.msra.mxu0 %v696
        %703 = vmatprep.subr.mxu0 0.0
        %704 = vmatpush1.msra.mxu0 0.0
        %705 = vmatprep.subr.mxu0 0.0
        %706 = vmatpush1.msra.mxu0 0.0
        %707 = vmatprep.subr.mxu0 0.0
        %708 = vmatpush1.msra.mxu0 0.0
        %709 = vmatprep.subr.mxu0 0.0
        %710 = vmatpush1.msra.mxu0 0.0
        %711 = vmatprep.subr.mxu0 0.0
        %712 = vmatpush1.msra.mxu0 0.0
        %713 = vmatprep.subr.mxu0 0.0
        %714 = vmatpush1.msra.mxu0 0.0
        %715 = vmatprep.subr.mxu0 0.0
        %716 = vmatpush1.msra.mxu0 0.0
        %717 = vmatprep.subr.mxu0 0.0
        %718 = vmatpush1.msra.mxu0 0.0
        %719 = vmatprep.subr.mxu0 0.0
        %720 = vmatpush1.msra.mxu0 0.0
        %721 = vmatprep.subr.mxu0 0.0
        %722 = vmatpush1.msra.mxu0 0.0
        %723 = vmatprep.subr.mxu0 0.0
        %724 = vmatpush1.msra.mxu0 0.0
        %725 = vmatprep.subr.mxu0 0.0
        %726 = vmatpush1.msra.mxu0 0.0
        %727 = vmatprep.subr.mxu0 0.0
        %728 = vmatpush1.msra.mxu0 0.0
        %729 = vmatprep.subr.mxu0 0.0
        %730 = vmatpush1.msra.mxu0 0.0
        %731 = vmatprep.subr.mxu0 0.0
        %732 = vmatpush1.msra.mxu0 0.0
        %733 = vmatprep.subr.mxu0 0.0
        %734 = vmatpush1.msra.mxu0 0.0
        %735 = vmatprep.subr.mxu0 0.0
        %736 = vmatpush1.msra.mxu0 0.0
        %737 = vmatprep.subr.mxu0 0.0
        %738 = vmatpush1.msra.mxu0 0.0
        %739 = vmatprep.subr.mxu0 0.0
        %740 = vmatpush1.msra.mxu0 0.0
        %741 = vmatprep.subr.mxu0 0.0
        %742 = vmatpush1.msra.mxu0 0.0
        %743 = vmatprep.subr.mxu0 0.0
        %744 = vmatpush1.msra.mxu0 0.0
        %745 = vmatprep.subr.mxu0 0.0
        %746 = vmatpush1.msra.mxu0 0.0
        %747 = vmatprep.subr.mxu0 0.0
        %748 = vmatpush1.msra.mxu0 0.0
        %749 = vmatprep.subr.mxu0 0.0
        %750 = vmatpush1.msra.mxu0 0.0
        %751 = vmatprep.subr.mxu0 0.0
        %752 = vmatpush1.msra.mxu0 0.0
        %753 = vmatprep.subr.mxu0 0.0
        %754 = vmatpush1.msra.mxu0 0.0
        %755 = vmatprep.subr.mxu0 0.0
        %756 = vmatpush1.msra.mxu0 0.0
        %757 = vmatprep.subr.mxu0 0.0
        %758 = vmatpush1.msra.mxu0 0.0
        %759 = vmatprep.subr.mxu0 0.0
        %760 = vmatpush1.msra.mxu0 0.0
        %761 = vmatprep.subr.mxu0 0.0
        %762 = vmatpush1.msra.mxu0 0.0
        %763 = vmatprep.subr.mxu0 0.0
        %764 = vmatpush1.msra.mxu0 0.0
        %765 = vmatprep.mubr.f32.mxu0 0.0
        %766 = vmatmul.mubr.f32.gmra.mrb[0].mxu0 %v699
        %v767 = vpop.f32.mrb[0].mxu0
        %v768 = vadd.f32 %v377, %v767
        %v769 = vpop.f32.mrb[0].mxu0
        %770 = vdwg.mxu0
        %v771 = vxor.u32 %v768, 2147483648
        %v772 = vmul.f32 %v771, 1.442695
        %v773 = vpow.pop %v772
        %v774 = vadd.f32 %v773, 1.0
        %v775 = vrcp.pop %v774
        %v776 = vmul.f32 1.0, %v775
        %vm777 = vcmask 130048
        %v779 = vsel %vm777, %v693, 0
        %781 = vmatprep.subr.mxu0 %v446
        %782 = vmatpush1.msra.mxu0 %v445
        %783 = vmatprep.subr.mxu0 %v448
        %784 = vmatpush1.msra.mxu0 %v447
        %785 = vmatprep.subr.mxu0 0.0
        %786 = vmatpush1.msra.mxu0 0.0
        %787 = vmatprep.subr.mxu0 0.0
        %788 = vmatpush1.msra.mxu0 0.0
        %789 = vmatprep.subr.mxu0 0.0
        %790 = vmatpush1.msra.mxu0 0.0
        %791 = vmatprep.subr.mxu0 0.0
        %792 = vmatpush1.msra.mxu0 0.0
        %793 = vmatprep.subr.mxu0 0.0
        %794 = vmatpush1.msra.mxu0 0.0
        %795 = vmatprep.subr.mxu0 0.0
        %796 = vmatpush1.msra.mxu0 0.0
        %797 = vmatprep.subr.mxu0 0.0
        %798 = vmatpush1.msra.mxu0 0.0
        %799 = vmatprep.subr.mxu0 0.0
        %800 = vmatpush1.msra.mxu0 0.0
        %801 = vmatprep.subr.mxu0 0.0
        %802 = vmatpush1.msra.mxu0 0.0
        %803 = vmatprep.subr.mxu0 0.0
        %804 = vmatpush1.msra.mxu0 0.0
        %805 = vmatprep.subr.mxu0 0.0
        %806 = vmatpush1.msra.mxu0 0.0
        %807 = vmatprep.subr.mxu0 0.0
        %808 = vmatpush1.msra.mxu0 0.0
        %809 = vmatprep.subr.mxu0 0.0
        %810 = vmatpush1.msra.mxu0 0.0
        %811 = vmatprep.subr.mxu0 0.0
        %812 = vmatpush1.msra.mxu0 0.0
        %813 = vmatprep.subr.mxu0 0.0
        %814 = vmatpush1.msra.mxu0 0.0
        %815 = vmatprep.subr.mxu0 0.0
        %816 = vmatpush1.msra.mxu0 0.0
        %817 = vmatprep.subr.mxu0 0.0
        %818 = vmatpush1.msra.mxu0 0.0
        %819 = vmatprep.subr.mxu0 0.0
        %820 = vmatpush1.msra.mxu0 0.0
        %821 = vmatprep.subr.mxu0 0.0
        %822 = vmatpush1.msra.mxu0 0.0
        %823 = vmatprep.subr.mxu0 0.0
        %824 = vmatpush1.msra.mxu0 0.0
        %825 = vmatprep.subr.mxu0 0.0
        %826 = vmatpush1.msra.mxu0 0.0
        %827 = vmatprep.subr.mxu0 0.0
        %828 = vmatpush1.msra.mxu0 0.0
        %829 = vmatprep.subr.mxu0 0.0
        %830 = vmatpush1.msra.mxu0 0.0
        %831 = vmatprep.subr.mxu0 0.0
        %832 = vmatpush1.msra.mxu0 0.0
        %833 = vmatprep.subr.mxu0 0.0
        %834 = vmatpush1.msra.mxu0 0.0
        %835 = vmatprep.subr.mxu0 0.0
        %836 = vmatpush1.msra.mxu0 0.0
        %837 = vmatprep.subr.mxu0 0.0
        %838 = vmatpush1.msra.mxu0 0.0
        %839 = vmatprep.subr.mxu0 0.0
        %840 = vmatpush1.msra.mxu0 0.0
        %841 = vmatprep.subr.mxu0 0.0
        %842 = vmatpush1.msra.mxu0 0.0
        %843 = vmatprep.subr.mxu0 0.0
        %844 = vmatpush1.msra.mxu0 0.0
        %845 = vmatprep.mubr.f32.mxu0 0.0
        %846 = vmatmul.mubr.f32.gmra.mrb[0].mxu0 %v779
        %v847 = vpop.f32.mrb[0].mxu0
        %v848 = vadd.f32 0.0, %v847
        %v849 = vpop.f32.mrb[0].mxu0
        %v850 = vadd.f32 0.0, %v849
        %851 = vdwg.mxu0
        %v853 = vsel %vm777, %v776, 0
        %855 = vmatprep.subr.mxu0 %v452
        %856 = vmatpush1.msra.mxu0 %v451
        %857 = vmatprep.subr.mxu0 %v454
        %858 = vmatpush1.msra.mxu0 %v453
        %859 = vmatprep.subr.mxu0 0.0
        %860 = vmatpush1.msra.mxu0 0.0
        %861 = vmatprep.subr.mxu0 0.0
        %862 = vmatpush1.msra.mxu0 0.0
        %863 = vmatprep.subr.mxu0 0.0
        %864 = vmatpush1.msra.mxu0 0.0
        %865 = vmatprep.subr.mxu0 0.0
        %866 = vmatpush1.msra.mxu0 0.0
        %867 = vmatprep.subr.mxu0 0.0
        %868 = vmatpush1.msra.mxu0 0.0
        %869 = vmatprep.subr.mxu0 0.0
        %870 = vmatpush1.msra.mxu0 0.0
        %871 = vmatprep.subr.mxu0 0.0
        %872 = vmatpush1.msra.mxu0 0.0
        %873 = vmatprep.subr.mxu0 0.0
        %874 = vmatpush1.msra.mxu0 0.0
        %875 = vmatprep.subr.mxu0 0.0
        %876 = vmatpush1.msra.mxu0 0.0
        %877 = vmatprep.subr.mxu0 0.0
        %878 = vmatpush1.msra.mxu0 0.0
        %879 = vmatprep.subr.mxu0 0.0
        %880 = vmatpush1.msra.mxu0 0.0
        %881 = vmatprep.subr.mxu0 0.0
        %882 = vmatpush1.msra.mxu0 0.0
        %883 = vmatprep.subr.mxu0 0.0
        %884 = vmatpush1.msra.mxu0 0.0
        %885 = vmatprep.subr.mxu0 0.0
        %886 = vmatpush1.msra.mxu0 0.0
        %887 = vmatprep.subr.mxu0 0.0
        %888 = vmatpush1.msra.mxu0 0.0
        %889 = vmatprep.subr.mxu0 0.0
        %890 = vmatpush1.msra.mxu0 0.0
        %891 = vmatprep.subr.mxu0 0.0
        %892 = vmatpush1.msra.mxu0 0.0
        %893 = vmatprep.subr.mxu0 0.0
        %894 = vmatpush1.msra.mxu0 0.0
        %895 = vmatprep.subr.mxu0 0.0
        %896 = vmatpush1.msra.mxu0 0.0
        %897 = vmatprep.subr.mxu0 0.0
        %898 = vmatpush1.msra.mxu0 0.0
        %899 = vmatprep.subr.mxu0 0.0
        %900 = vmatpush1.msra.mxu0 0.0
        %901 = vmatprep.subr.mxu0 0.0
        %902 = vmatpush1.msra.mxu0 0.0
        %903 = vmatprep.subr.mxu0 0.0
        %904 = vmatpush1.msra.mxu0 0.0
        %905 = vmatprep.subr.mxu0 0.0
        %906 = vmatpush1.msra.mxu0 0.0
        %907 = vmatprep.subr.mxu0 0.0
        %908 = vmatpush1.msra.mxu0 0.0
        %909 = vmatprep.subr.mxu0 0.0
        %910 = vmatpush1.msra.mxu0 0.0
        %911 = vmatprep.subr.mxu0 0.0
        %912 = vmatpush1.msra.mxu0 0.0
        %913 = vmatprep.subr.mxu0 0.0
        %914 = vmatpush1.msra.mxu0 0.0
        %915 = vmatprep.subr.mxu0 0.0
        %916 = vmatpush1.msra.mxu0 0.0
        %917 = vmatprep.subr.mxu0 0.0
        %918 = vmatpush1.msra.mxu0 0.0
        %919 = vmatprep.mubr.f32.mxu0 0.0
        %920 = vmatmul.mubr.f32.gmra.mrb[0].mxu0 %v853
        %v921 = vpop.f32.mrb[0].mxu0
        %v922 = vadd.f32 0.0, %v921
        %v923 = vpop.f32.mrb[0].mxu0
        %v924 = vadd.f32 0.0, %v923
        %925 = vdwg.mxu0
        %v926 = vmul.f32 %v848, %v922
        %v927 = vmul.f32 %v850, %v924
        %v930 = vcombine.low %v926, %v927
        %v932 = vmul.f32 %v455, %v930
        %933 = vst [vmem:[%s352] sm:$0xff] %v932
        %s934 = sand.u32 %s247, 1
        %s935 = scalar_lea.sflag [#allocation3], %s934
        %s936 = sand.u32 %s247, 1
        %s937 = smul.addr %s936, 8
        %s938 = scalar_lea.vmem [#allocation2], %s937
        // Predicated region
        $region61: #{tpu_custom_call.1} parent=59 // pred_check
          %p939 = pneg %p257
        $region62: #{tpu_custom_call.1} parent=59 // pred_check_branch
          %941 = sbr.rel (%p939) target = $region64
        $region63: #{tpu_custom_call.1} parent=59 // pred_region
          %s943 = ssub.s32 128, 128
          %944 = vsyncadd %s935, %s943
          %s945 = smul.addr %s24, 2
          %s946 = smul.addr %s945, 64
          %s947 = scalar_lea.hbm %s10, %s946
          %s949 = sshll.u32 %s938, 4
          %s950 = int_to_ptr.vmem [resolvable:$true] %s949
          %952 = dma.vmem_to_hbm [thread:$0]  %s950, 128, %s947, %s935
        $region64: #{tpu_custom_call.1} parent=59 // pred_fallthru
          _
      $region60: #{tpu_custom_call.1} parent=5 // pred_fallthru
        _
      %p953 = scmp.le.s32.totalorder 2, %s19
      // Predicated region
      $region65: #{tpu_custom_call.1} parent=5 // pred_check
        %p954 = pneg %p953
      $region66: #{tpu_custom_call.1} parent=5 // pred_check_branch
        %956 = sbr.rel (%p954) target = $region68
      $region67: #{tpu_custom_call.1} parent=5 // pred_region
        %s957 = ssub.s32 %s19, 2
        // Predicated region
        $region69: #{tpu_custom_call.1} parent=67 // pred_check
          %p958 = pneg %p263
        $region70: #{tpu_custom_call.1} parent=67 // pred_check_branch
          %960 = sbr.rel (%p958) target = $region72
        $region71: #{tpu_custom_call.1} parent=67 // pred_region
          %s961 = sand.u32 %s248, 1
          %s962 = scalar_lea.sflag [#allocation3], %s961
          %s963 = sand.u32 %s248, 1
          %s964 = smul.addr %s963, 8
          %s965 = scalar_lea.vmem [#allocation2], %s964
          %966 = dma.done %s962, 128
        $region72: #{tpu_custom_call.1} parent=67 // pred_fallthru
          _
      $region68: #{tpu_custom_call.1} parent=5 // pred_fallthru
        _
    $region6: #{tpu_custom_call.1} parent=1 // loop_footer
      %s23 = sadd.s32 1, %s19
    $region7: #{tpu_custom_call.1} parent=1 // loop_footer_branch
      %18 = sbr.rel target = $region3
    $region8: #{tpu_custom_call.1} parent=1 // loop_exit
      _
    %967 = vsyncpa [#allocation3], 1
    %s968 = scalar_lea.sflag [#allocation3], 1
    %969 = vsyncpa %s968, 1

// kernel: tpu_custom_call.1
$region0: #{tpu_custom_call.1}
  #allocation0 [shape = 'u32[]', space=smem, size = 0x4, offset = 0x4, fixed_abs, tag = 'smem constant byte address 0x4 - core index']
  #allocation1 [shape = 'u32[144,128]{1,0:T(1,128)}', space=vmem, size = 0x12000, scoped, tag = 'internal scratch']
  %s0 = inlined_call_operand.vmem [shape: f32[2,4,256], index: 0, kind: input, shape index: {}]
  %s1 = inlined_call_operand.vmem [shape: f32[8,4], index: 1, kind: input, shape index: {}]
  %s2 = inlined_call_operand.vmem [shape: f32[8,1], index: 2, kind: input, shape index: {}]
  %s3 = inlined_call_operand.vmem [shape: f32[4,8], index: 3, kind: input, shape index: {}]
  %s4 = inlined_call_operand.vmem [shape: f32[4,1], index: 4, kind: input, shape index: {}]
  %s5 = inlined_call_operand.vmem [shape: f32[4,8], index: 5, kind: input, shape index: {}]
  %s6 = inlined_call_operand.vmem [shape: f32[4,1], index: 6, kind: input, shape index: {}]
  %s7 = inlined_call_operand.vmem [shape: bf16[256,32], index: 7, kind: input, shape index: {}]
  %s8 = inlined_call_operand.vmem [shape: bf16[16,256], index: 8, kind: input, shape index: {}]
  %s9 = inlined_call_operand.vmem [shape: bf16[16,256], index: 9, kind: input, shape index: {}]
  %s10 = inlined_call_operand.hbm [shape: f32[2,4,256], index: 10, kind: output, shape index: {}]
  %s11 = sld [smem:[#allocation0]]
  $region73: #{tpu_custom_call.1} parent=0
    _
  %s13 = ssub.s32 1, %s11
  %s14 = scalar_select 0, %s13, %s11
  $region1: #{tpu_custom_call.1} parent=0
    #allocation2 [shape = 'u8[8192]{0}', space=vmem, size = 0x2000, scoped, tag = 'output window, operand 0']
    #allocation3 [shape = 's32[2]{0}', space=sflag, size = 0x8, scoped, tag = 'scoped memory for tpu_custom_call.1']
    %15 = vsyncpa [#allocation3], 0
    %s16 = scalar_lea.sflag [#allocation3], 1
    %17 = vsyncpa %s16, 0
    loop: start=0, step=1, limit=4
    $region2: #{tpu_custom_call.1} parent=1 // loop_pre_header
      _
    $region3: #{tpu_custom_call.1} parent=1 // loop_header
      %s19 = sphi 0, %s23
      %p20 = scmp.ge.s32.totalorder %s19, 4
      %s29 = sphi 0, %s31
      %s32 = sphi 0, %s29
      %s33 = sphi 0, %s32
      %s49 = sphi 0, %s33
      %s53 = sphi 0, %s53
      %s55 = sphi 0, %s53
      %s56 = sphi 0, %s55
      %s70 = sphi 0, %s56
      %s74 = sphi 0, %s74
      %s76 = sphi 0, %s74
      %s77 = sphi 0, %s76
      %s91 = sphi 0, %s77
      %s95 = sphi 0, %s95
      %s97 = sphi 0, %s95
      %s98 = sphi 0, %s97
      %s112 = sphi 0, %s98
      %s116 = sphi 0, %s116
      %s118 = sphi 0, %s116
      %s119 = sphi 0, %s118
      %s133 = sphi 0, %s119
      %s137 = sphi 0, %s137
      %s139 = sphi 0, %s137
      %s140 = sphi 0, %s139
      %s154 = sphi 0, %s140
      %s158 = sphi 0, %s158
      %s160 = sphi 0, %s158
      %s161 = sphi 0, %s160
      %s175 = sphi 0, %s161
      %s179 = sphi 0, %s179
      %s181 = sphi 0, %s179
      %s182 = sphi 0, %s181
      %s196 = sphi 0, %s182
      %s200 = sphi 0, %s200
      %s202 = sphi 0, %s200
      %s203 = sphi 0, %s202
      %s217 = sphi 0, %s203
      %s221 = sphi 0, %s221
      %s223 = sphi 0, %s221
      %s224 = sphi 0, %s223
      %s238 = sphi 0, %s224
      %s244 = sphi 0, %s246
      %s247 = sphi 0, %s244
      %s248 = sphi 0, %s247
      %s264 = sphi 0, %s248
    $region4: #{tpu_custom_call.1} parent=1 // loop_header_branch
      %22 = sbr.rel (%p20) target = $region8
    $region5: #{tpu_custom_call.1} parent=1 // loop_body
      %s24 = ssub.s32 %s19, 1
      %s25 = ssub.s32 %s19, 2
      %s26 = sadd.s32 %s19, 1
      %s27 = ssub.s32 %s19, %s26
      %p28 = scmp.eq.s32.totalorder %s27, 0
      %s30 = sadd.s32 %s29, 1
      %s31 = scalar_select %p28, %s29, %s30
      %p34 = pneg %p28
      %p35 = scmp.eq.s32.totalorder %s19, 1
      %p36 = por %p34, %p35
      %p37 = scmp.ne.s32.totalorder %s29, %s32
      %p38 = scmp.eq.s32.totalorder %s19, 0
      %p39 = por %p37, %p38
      %p40 = scmp.ne.s32.totalorder %s29, %s32
      %p41 = scmp.eq.s32.totalorder %s24, 1
      %p42 = por %p40, %p41
      %p43 = scmp.ne.s32.totalorder %s32, %s33
      %p44 = scmp.eq.s32.totalorder %s24, 0
      %p45 = por %p43, %p44
      %p46 = scmp.ne.s32.totalorder %s32, %s33
      %p47 = scmp.eq.s32.totalorder %s25, 1
      %p48 = por %p46, %p47
      %p50 = scmp.ne.s32.totalorder %s33, %s49
      %p51 = scmp.eq.s32.totalorder %s25, 0
      %p52 = por %p50, %p51
      %s54 = sadd.s32 %s53, 1
      %p57 = scmp.eq.s32.totalorder %s19, 1
      %p58 = scmp.ne.s32.totalorder %s53, %s55
      %p59 = scmp.eq.s32.totalorder %s19, 0
      %p60 = por %p58, %p59
      %p61 = scmp.ne.s32.totalorder %s53, %s55
      %p62 = scmp.eq.s32.totalorder %s24, 1
      %p63 = por %p61, %p62
      %p64 = scmp.ne.s32.totalorder %s55, %s56
      %p65 = scmp.eq.s32.totalorder %s24, 0
      %p66 = por %p64, %p65
      %p67 = scmp.ne.s32.totalorder %s55, %s56
      %p68 = scmp.eq.s32.totalorder %s25, 1
      %p69 = por %p67, %p68
      %p71 = scmp.ne.s32.totalorder %s56, %s70
      %p72 = scmp.eq.s32.totalorder %s25, 0
      %p73 = por %p71, %p72
      %s75 = sadd.s32 %s74, 1
      %p78 = scmp.eq.s32.totalorder %s19, 1
      %p79 = scmp.ne.s32.totalorder %s74, %s76
      %p80 = scmp.eq.s32.totalorder %s19, 0
      %p81 = por %p79, %p80
      %p82 = scmp.ne.s32.totalorder %s74, %s76
      %p83 = scmp.eq.s32.totalorder %s24, 1
      %p84 = por %p82, %p83
      %p85 = scmp.ne.s32.totalorder %s76, %s77
      %p86 = scmp.eq.s32.totalorder %s24, 0
      %p87 = por %p85, %p86
      %p88 = scmp.ne.s32.totalorder %s76, %s77
      %p89 = scmp.eq.s32.totalorder %s25, 1
      %p90 = por %p88, %p89
      %p92 = scmp.ne.s32.totalorder %s77, %s91
      %p93 = scmp.eq.s32.totalorder %s25, 0
      %p94 = por %p92, %p93
      %s96 = sadd.s32 %s95, 1
      %p99 = scmp.eq.s32.totalorder %s19, 1
      %p100 = scmp.ne.s32.totalorder %s95, %s97
      %p101 = scmp.eq.s32.totalorder %s19, 0
      %p102 = por %p100, %p101
      %p103 = scmp.ne.s32.totalorder %s95, %s97
      %p104 = scmp.eq.s32.totalorder %s24, 1
      %p105 = por %p103, %p104
      %p106 = scmp.ne.s32.totalorder %s97, %s98
      %p107 = scmp.eq.s32.totalorder %s24, 0
      %p108 = por %p106, %p107
      %p109 = scmp.ne.s32.totalorder %s97, %s98
      %p110 = scmp.eq.s32.totalorder %s25, 1
      %p111 = por %p109, %p110
      %p113 = scmp.ne.s32.totalorder %s98, %s112
      %p114 = scmp.eq.s32.totalorder %s25, 0
      %p115 = por %p113, %p114
      %s117 = sadd.s32 %s116, 1
      %p120 = scmp.eq.s32.totalorder %s19, 1
      %p121 = scmp.ne.s32.totalorder %s116, %s118
      %p122 = scmp.eq.s32.totalorder %s19, 0
      %p123 = por %p121, %p122
      %p124 = scmp.ne.s32.totalorder %s116, %s118
      %p125 = scmp.eq.s32.totalorder %s24, 1
      %p126 = por %p124, %p125
      %p127 = scmp.ne.s32.totalorder %s118, %s119
      %p128 = scmp.eq.s32.totalorder %s24, 0
      %p129 = por %p127, %p128
      %p130 = scmp.ne.s32.totalorder %s118, %s119
      %p131 = scmp.eq.s32.totalorder %s25, 1
      %p132 = por %p130, %p131
      %p134 = scmp.ne.s32.totalorder %s119, %s133
      %p135 = scmp.eq.s32.totalorder %s25, 0
      %p136 = por %p134, %p135
      %s138 = sadd.s32 %s137, 1
      %p141 = scmp.eq.s32.totalorder %s19, 1
      %p142 = scmp.ne.s32.totalorder %s137, %s139
      %p143 = scmp.eq.s32.totalorder %s19, 0
      %p144 = por %p142, %p143
      %p145 = scmp.ne.s32.totalorder %s137, %s139
      %p146 = scmp.eq.s32.totalorder %s24, 1
      %p147 = por %p145, %p146
      %p148 = scmp.ne.s32.totalorder %s139, %s140
      %p149 = scmp.eq.s32.totalorder %s24, 0
      %p150 = por %p148, %p149
      %p151 = scmp.ne.s32.totalorder %s139, %s140
      %p152 = scmp.eq.s32.totalorder %s25, 1
      %p153 = por %p151, %p152
      %p155 = scmp.ne.s32.totalorder %s140, %s154
      %p156 = scmp.eq.s32.totalorder %s25, 0
      %p157 = por %p155, %p156
      %s159 = sadd.s32 %s158, 1
      %p162 = scmp.eq.s32.totalorder %s19, 1
      %p163 = scmp.ne.s32.totalorder %s158, %s160
      %p164 = scmp.eq.s32.totalorder %s19, 0
      %p165 = por %p163, %p164
      %p166 = scmp.ne.s32.totalorder %s158, %s160
      %p167 = scmp.eq.s32.totalorder %s24, 1
      %p168 = por %p166, %p167
      %p169 = scmp.ne.s32.totalorder %s160, %s161
      %p170 = scmp.eq.s32.totalorder %s24, 0
      %p171 = por %p169, %p170
      %p172 = scmp.ne.s32.totalorder %s160, %s161
      %p173 = scmp.eq.s32.totalorder %s25, 1
      %p174 = por %p172, %p173
      %p176 = scmp.ne.s32.totalorder %s161, %s175
      %p177 = scmp.eq.s32.totalorder %s25, 0
      %p178 = por %p176, %p177
      %s180 = sadd.s32 %s179, 1
      %p183 = scmp.eq.s32.totalorder %s19, 1
      %p184 = scmp.ne.s32.totalorder %s179, %s181
      %p185 = scmp.eq.s32.totalorder %s19, 0
      %p186 = por %p184, %p185
      %p187 = scmp.ne.s32.totalorder %s179, %s181
      %p188 = scmp.eq.s32.totalorder %s24, 1
      %p189 = por %p187, %p188
      %p190 = scmp.ne.s32.totalorder %s181, %s182
      %p191 = scmp.eq.s32.totalorder %s24, 0
      %p192 = por %p190, %p191
      %p193 = scmp.ne.s32.totalorder %s181, %s182
      %p194 = scmp.eq.s32.totalorder %s25, 1
      %p195 = por %p193, %p194
      %p197 = scmp.ne.s32.totalorder %s182, %s196
      %p198 = scmp.eq.s32.totalorder %s25, 0
      %p199 = por %p197, %p198
      %s201 = sadd.s32 %s200, 1
      %p204 = scmp.eq.s32.totalorder %s19, 1
      %p205 = scmp.ne.s32.totalorder %s200, %s202
      %p206 = scmp.eq.s32.totalorder %s19, 0
      %p207 = por %p205, %p206
      %p208 = scmp.ne.s32.totalorder %s200, %s202
      %p209 = scmp.eq.s32.totalorder %s24, 1
      %p210 = por %p208, %p209
      %p211 = scmp.ne.s32.totalorder %s202, %s203
      %p212 = scmp.eq.s32.totalorder %s24, 0
      %p213 = por %p211, %p212
      %p214 = scmp.ne.s32.totalorder %s202, %s203
      %p215 = scmp.eq.s32.totalorder %s25, 1
      %p216 = por %p214, %p215
      %p218 = scmp.ne.s32.totalorder %s203, %s217
      %p219 = scmp.eq.s32.totalorder %s25, 0
      %p220 = por %p218, %p219
      %s222 = sadd.s32 %s221, 1
      %p225 = scmp.eq.s32.totalorder %s19, 1
      %p226 = scmp.ne.s32.totalorder %s221, %s223
      %p227 = scmp.eq.s32.totalorder %s19, 0
      %p228 = por %p226, %p227
      %p229 = scmp.ne.s32.totalorder %s221, %s223
      %p230 = scmp.eq.s32.totalorder %s24, 1
      %p231 = por %p229, %p230
      %p232 = scmp.ne.s32.totalorder %s223, %s224
      %p233 = scmp.eq.s32.totalorder %s24, 0
      %p234 = por %p232, %p233
      %p235 = scmp.ne.s32.totalorder %s223, %s224
      %p236 = scmp.eq.s32.totalorder %s25, 1
      %p237 = por %p235, %p236
      %p239 = scmp.ne.s32.totalorder %s224, %s238
      %p240 = scmp.eq.s32.totalorder %s25, 0
      %p241 = por %p239, %p240
      %s242 = ssub.s32 %s19, %s26
      %p243 = scmp.eq.s32.totalorder %s242, 0
      %s245 = sadd.s32 %s244, 1
      %s246 = scalar_select %p243, %s244, %s245
      %p249 = pneg %p243
      %p250 = scmp.eq.s32.totalorder %s19, 1
      %p251 = por %p249, %p250
      %p252 = scmp.ne.s32.totalorder %s244, %s247
      %p253 = scmp.eq.s32.totalorder %s19, 0
      %p254 = por %p252, %p253
      %p255 = scmp.ne.s32.totalorder %s244, %s247
      %p256 = scmp.eq.s32.totalorder %s24, 1
      %p257 = por %p255, %p256
      %p258 = scmp.ne.s32.totalorder %s247, %s248
      %p259 = scmp.eq.s32.totalorder %s24, 0
      %p260 = por %p258, %p259
      %p261 = scmp.ne.s32.totalorder %s247, %s248
      %p262 = scmp.eq.s32.totalorder %s25, 1
      %p263 = por %p261, %p262
      %p265 = scmp.ne.s32.totalorder %s248, %s264
      %p266 = scmp.eq.s32.totalorder %s25, 0
      %p267 = por %p265, %p266
      %p268 = scmp.le.s32.totalorder 1, %s19
      %p269 = scmp.lt.s32.totalorder %s19, 3
      %p270 = pnand %p268, %p269
      %p271 = pneg %p270
      // Predicated region
      $region9: #{tpu_custom_call.1} parent=5 // pred_check
        _
      $region10: #{tpu_custom_call.1} parent=5 // pred_check_branch
        %273 = sbr.rel (%p270) target = $region12
      $region11: #{tpu_custom_call.1} parent=5 // pred_region
        %s274 = ssub.s32 %s19, 1
        // Predicated region
        $region13: #{tpu_custom_call.1} parent=11 // pred_check
          %p275 = pneg %p66
        $region14: #{tpu_custom_call.1} parent=11 // pred_check_branch
          %277 = sbr.rel (%p275) target = $region16
        $region15: #{tpu_custom_call.1} parent=11 // pred_region
          _
        $region16: #{tpu_custom_call.1} parent=11 // pred_fallthru
          _
        // Predicated region
        $region17: #{tpu_custom_call.1} parent=11 // pred_check
          %p278 = pneg %p87
        $region18: #{tpu_custom_call.1} parent=11 // pred_check_branch
          %280 = sbr.rel (%p278) target = $region20
        $region19: #{tpu_custom_call.1} parent=11 // pred_region
          _
        $region20: #{tpu_custom_call.1} parent=11 // pred_fallthru
          _
        // Predicated region
        $region21: #{tpu_custom_call.1} parent=11 // pred_check
          %p281 = pneg %p108
        $region22: #{tpu_custom_call.1} parent=11 // pred_check_branch
          %283 = sbr.rel (%p281) target = $region24
        $region23: #{tpu_custom_call.1} parent=11 // pred_region
          _
        $region24: #{tpu_custom_call.1} parent=11 // pred_fallthru
          _
        // Predicated region
        $region25: #{tpu_custom_call.1} parent=11 // pred_check
          %p284 = pneg %p129
        $region26: #{tpu_custom_call.1} parent=11 // pred_check_branch
          %286 = sbr.rel (%p284) target = $region28
        $region27: #{tpu_custom_call.1} parent=11 // pred_region
          _
        $region28: #{tpu_custom_call.1} parent=11 // pred_fallthru
          _
        // Predicated region
        $region29: #{tpu_custom_call.1} parent=11 // pred_check
          %p287 = pneg %p150
        $region30: #{tpu_custom_call.1} parent=11 // pred_check_branch
          %289 = sbr.rel (%p287) target = $region32
        $region31: #{tpu_custom_call.1} parent=11 // pred_region
          _
        $region32: #{tpu_custom_call.1} parent=11 // pred_fallthru
          _
        // Predicated region
        $region33: #{tpu_custom_call.1} parent=11 // pred_check
          %p290 = pneg %p171
        $region34: #{tpu_custom_call.1} parent=11 // pred_check_branch
          %292 = sbr.rel (%p290) target = $region36
        $region35: #{tpu_custom_call.1} parent=11 // pred_region
          _
        $region36: #{tpu_custom_call.1} parent=11 // pred_fallthru
          _
        // Predicated region
        $region37: #{tpu_custom_call.1} parent=11 // pred_check
          %p293 = pneg %p192
        $region38: #{tpu_custom_call.1} parent=11 // pred_check_branch
          %295 = sbr.rel (%p293) target = $region40
        $region39: #{tpu_custom_call.1} parent=11 // pred_region
          _
        $region40: #{tpu_custom_call.1} parent=11 // pred_fallthru
          _
        // Predicated region
        $region41: #{tpu_custom_call.1} parent=11 // pred_check
          %p296 = pneg %p213
        $region42: #{tpu_custom_call.1} parent=11 // pred_check_branch
          %298 = sbr.rel (%p296) target = $region44
        $region43: #{tpu_custom_call.1} parent=11 // pred_region
          _
        $region44: #{tpu_custom_call.1} parent=11 // pred_fallthru
          _
        // Predicated region
        $region45: #{tpu_custom_call.1} parent=11 // pred_check
          %p299 = pneg %p234
        $region46: #{tpu_custom_call.1} parent=11 // pred_check_branch
          %301 = sbr.rel (%p299) target = $region48
        $region47: #{tpu_custom_call.1} parent=11 // pred_region
          _
        $region48: #{tpu_custom_call.1} parent=11 // pred_fallthru
          _
      $region12: #{tpu_custom_call.1} parent=5 // pred_fallthru
        _
      %p302 = scmp.lt.s32.totalorder %s19, 2
      // Predicated region
      $region49: #{tpu_custom_call.1} parent=5 // pred_check
        %p303 = pneg %p302
      $region50: #{tpu_custom_call.1} parent=5 // pred_check_branch
        %305 = sbr.rel (%p303) target = $region52
      $region51: #{tpu_custom_call.1} parent=5 // pred_region
        // Predicated region
        $region53: #{tpu_custom_call.1} parent=51 // pred_check
          %p306 = pneg %p39
        $region54: #{tpu_custom_call.1} parent=51 // pred_check_branch
          %308 = sbr.rel (%p306) target = $region56
        $region55: #{tpu_custom_call.1} parent=51 // pred_region
          %p309 = scmp.lt.s32.totalorder %s19, 1
          %s310 = scalar_select %p309, %s19, 1
          %s311 = smul.addr %s310, 2
          %s312 = smul.addr %s311, 4
          %s313 = scalar_lea.vmem %s0, %s312
        $region56: #{tpu_custom_call.1} parent=51 // pred_fallthru
          _
      $region52: #{tpu_custom_call.1} parent=5 // pred_fallthru
        _
      %p314 = scmp.le.s32.totalorder 1, %s19
      %p315 = scmp.lt.s32.totalorder %s19, 3
      %p316 = pnand %p314, %p315
      %p317 = pneg %p316
      // Predicated region
      $region57: #{tpu_custom_call.1} parent=5 // pred_check
        _
      $region58: #{tpu_custom_call.1} parent=5 // pred_check_branch
        %319 = sbr.rel (%p316) target = $region60
      $region59: #{tpu_custom_call.1} parent=5 // pred_region
        %s320 = ssub.s32 %s19, 1
        %p321 = scmp.lt.s32.totalorder %s24, 1
        %s322 = scalar_select %p321, %s24, 1
        %s323 = smul.addr %s322, 2
        %s324 = smul.addr %s323, 4
        %s325 = scalar_lea.vmem %s0, %s324
        %p326 = pneg %p45
        %p327 = pneg %p42
        %p328 = pneg %p66
        %p329 = pneg %p63
        %p330 = pneg %p87
        %p331 = pneg %p84
        %p332 = pneg %p108
        %p333 = pneg %p105
        %p334 = pneg %p129
        %p335 = pneg %p126
        %p336 = pneg %p150
        %p337 = pneg %p147
        %p338 = pneg %p171
        %p339 = pneg %p168
        %p340 = pneg %p192
        %p341 = pneg %p189
        %p342 = pneg %p213
        %p343 = pneg %p210
        %p344 = pneg %p234
        %p345 = pneg %p231
        %p346 = pneg %p260
        %p347 = pneg %p257
        %s348 = sand.u32 %s247, 1
        %s349 = scalar_lea.sflag [#allocation3], %s348
        %s350 = sand.u32 %s247, 1
        %s351 = smul.addr %s350, 8
        %s352 = scalar_lea.vmem [#allocation2], %s351
        %p353 = scmp.lt.s32.totalorder %s24, 1
        %s354 = scalar_select %p353, %s24, 1
        %s355 = smul.addr %s354, 2
        %s356 = smul.addr %s355, 4
        %s357 = scalar_lea.vmem %s0, %s356
        %v358 = vld [vmem:[%s1] sm:$0xff]
        %v359 = vld [vmem:[%s3] sm:$0xf]
        %v360 = vld [vmem:[%s5] sm:$0xf]
        %v361 = vld [vmem:[%s2] sm:$0xff]
        %363 = vset.pattern.permute.xlu0 0
        %364 = vperm.xlu0 %363, %v361
        %v365 = vpop.permute.xlu0 %364
        %v367 = vld [vmem:[%s4] sm:$0xf]
        %369 = vset.pattern.permute.xlu0 0
        %370 = vperm.xlu0 %369, %v367
        %v371 = vpop.permute.xlu0 %370
        %v373 = vld [vmem:[%s6] sm:$0xf]
        %375 = vset.pattern.permute.xlu0 0
        %376 = vperm.xlu0 %375, %v373
        %v377 = vpop.permute.xlu0 %376
        %v379 = vld [vmem:[%s7] sm:$0xf]
        %v380 = vld [vmem:[%s7 + $0x4] sm:$0xf]
        %v381 = vld [vmem:[%s7 + $0x8] sm:$0xf]
        %v382 = vld [vmem:[%s7 + $0xc] sm:$0xf]
        %v383 = vld [vmem:[%s7 + $0x10] sm:$0xf]
        %v384 = vld [vmem:[%s7 + $0x14] sm:$0xf]
        %v385 = vld [vmem:[%s7 + $0x18] sm:$0xf]
        %v386 = vld [vmem:[%s7 + $0x1c] sm:$0xf]
        %v387 = vld [vmem:[%s7 + $0x20] sm:$0xf]
        %v388 = vld [vmem:[%s7 + $0x24] sm:$0xf]
        %v389 = vld [vmem:[%s7 + $0x28] sm:$0xf]
        %v390 = vld [vmem:[%s7 + $0x2c] sm:$0xf]
        %v391 = vld [vmem:[%s7 + $0x30] sm:$0xf]
        %v392 = vld [vmem:[%s7 + $0x34] sm:$0xf]
        %v393 = vld [vmem:[%s7 + $0x38] sm:$0xf]
        %v394 = vld [vmem:[%s7 + $0x3c] sm:$0xf]
        %v395 = vld [vmem:[%s7 + $0x40] sm:$0xf]
        %v396 = vld [vmem:[%s7 + $0x44] sm:$0xf]
        %v397 = vld [vmem:[%s7 + $0x48] sm:$0xf]
        %v398 = vld [vmem:[%s7 + $0x4c] sm:$0xf]
        %v399 = vld [vmem:[%s7 + $0x50] sm:$0xf]
        %v400 = vld [vmem:[%s7 + $0x54] sm:$0xf]
        %v401 = vld [vmem:[%s7 + $0x58] sm:$0xf]
        %v402 = vld [vmem:[%s7 + $0x5c] sm:$0xf]
        %v403 = vld [vmem:[%s7 + $0x60] sm:$0xf]
        %v404 = vld [vmem:[%s7 + $0x64] sm:$0xf]
        %v405 = vld [vmem:[%s7 + $0x68] sm:$0xf]
        %v406 = vld [vmem:[%s7 + $0x6c] sm:$0xf]
        %v407 = vld [vmem:[%s7 + $0x70] sm:$0xf]
        %v408 = vld [vmem:[%s7 + $0x74] sm:$0xf]
        %v409 = vld [vmem:[%s7 + $0x78] sm:$0xf]
        %v410 = vld [vmem:[%s7 + $0x7c] sm:$0xf]
        %v411 = vunpack.c.l.bf16 %v379
        %v412 = vunpack.c.l.bf16 %v380
        %v413 = vunpack.c.l.bf16 %v381
        %v414 = vunpack.c.l.bf16 %v382
        %v415 = vunpack.c.l.bf16 %v383
        %v416 = vunpack.c.l.bf16 %v384
        %v417 = vunpack.c.l.bf16 %v385
        %v418 = vunpack.c.l.bf16 %v386
        %v419 = vunpack.c.l.bf16 %v387
        %v420 = vunpack.c.l.bf16 %v388
        %v421 = vunpack.c.l.bf16 %v389
        %v422 = vunpack.c.l.bf16 %v390
        %v423 = vunpack.c.l.bf16 %v391
        %v424 = vunpack.c.l.bf16 %v392
        %v425 = vunpack.c.l.bf16 %v393
        %v426 = vunpack.c.l.bf16 %v394
        %v427 = vunpack.c.l.bf16 %v395
        %v428 = vunpack.c.l.bf16 %v396
        %v429 = vunpack.c.l.bf16 %v397
        %v430 = vunpack.c.l.bf16 %v398
        %v431 = vunpack.c.l.bf16 %v399
        %v432 = vunpack.c.l.bf16 %v400
        %v433 = vunpack.c.l.bf16 %v401
        %v434 = vunpack.c.l.bf16 %v402
        %v435 = vunpack.c.l.bf16 %v403
        %v436 = vunpack.c.l.bf16 %v404
        %v437 = vunpack.c.l.bf16 %v405
        %v438 = vunpack.c.l.bf16 %v406
        %v439 = vunpack.c.l.bf16 %v407
        %v440 = vunpack.c.l.bf16 %v408
        %v441 = vunpack.c.l.bf16 %v409
        %v442 = vunpack.c.l.bf16 %v410
        %v443 = vld [vmem:[%s8] sm:$0xff]
        %v444 = vld [vmem:[%s8 + $0x8] sm:$0xff]
        %v445 = vunpack.c.l.bf16 %v443
        %v446 = vunpack.c.h.bf16 %v443
        %v447 = vunpack.c.l.bf16 %v444
        %v448 = vunpack.c.h.bf16 %v444
        %v449 = vld [vmem:[%s9] sm:$0xff]
        %v450 = vld [vmem:[%s9 + $0x8] sm:$0xff]
        %v451 = vunpack.c.l.bf16 %v449
        %v452 = vunpack.c.h.bf16 %v449
        %v453 = vunpack.c.l.bf16 %v450
        %v454 = vunpack.c.h.bf16 %v450
        %v455 = vld [vmem:[%s357] sm:$0xff]
        %v457 = vcombine.high %v455, %v455
        %459 = vmatprep.subr.mxu0 0.0
        %460 = vmatpush1.msra.mxu0 %v411
        %461 = vmatprep.subr.mxu0 0.0
        %462 = vmatpush1.msra.mxu0 %v412
        %463 = vmatprep.subr.mxu0 0.0
        %464 = vmatpush1.msra.mxu0 %v413
        %465 = vmatprep.subr.mxu0 0.0
        %466 = vmatpush1.msra.mxu0 %v414
        %467 = vmatprep.subr.mxu0 0.0
        %468 = vmatpush1.msra.mxu0 %v415
        %469 = vmatprep.subr.mxu0 0.0
        %470 = vmatpush1.msra.mxu0 %v416
        %471 = vmatprep.subr.mxu0 0.0
        %472 = vmatpush1.msra.mxu0 %v417
        %473 = vmatprep.subr.mxu0 0.0
        %474 = vmatpush1.msra.mxu0 %v418
        %475 = vmatprep.subr.mxu0 0.0
        %476 = vmatpush1.msra.mxu0 %v419
        %477 = vmatprep.subr.mxu0 0.0
        %478 = vmatpush1.msra.mxu0 %v420
        %479 = vmatprep.subr.mxu0 0.0
        %480 = vmatpush1.msra.mxu0 %v421
        %481 = vmatprep.subr.mxu0 0.0
        %482 = vmatpush1.msra.mxu0 %v422
        %483 = vmatprep.subr.mxu0 0.0
        %484 = vmatpush1.msra.mxu0 %v423
        %485 = vmatprep.subr.mxu0 0.0
        %486 = vmatpush1.msra.mxu0 %v424
        %487 = vmatprep.subr.mxu0 0.0
        %488 = vmatpush1.msra.mxu0 %v425
        %489 = vmatprep.subr.mxu0 0.0
        %490 = vmatpush1.msra.mxu0 %v426
        %491 = vmatprep.subr.mxu0 0.0
        %492 = vmatpush1.msra.mxu0 %v427
        %493 = vmatprep.subr.mxu0 0.0
        %494 = vmatpush1.msra.mxu0 %v428
        %495 = vmatprep.subr.mxu0 0.0
        %496 = vmatpush1.msra.mxu0 %v429
        %497 = vmatprep.subr.mxu0 0.0
        %498 = vmatpush1.msra.mxu0 %v430
        %499 = vmatprep.subr.mxu0 0.0
        %500 = vmatpush1.msra.mxu0 %v431
        %501 = vmatprep.subr.mxu0 0.0
        %502 = vmatpush1.msra.mxu0 %v432
        %503 = vmatprep.subr.mxu0 0.0
        %504 = vmatpush1.msra.mxu0 %v433
        %505 = vmatprep.subr.mxu0 0.0
        %506 = vmatpush1.msra.mxu0 %v434
        %507 = vmatprep.subr.mxu0 0.0
        %508 = vmatpush1.msra.mxu0 %v435
        %509 = vmatprep.subr.mxu0 0.0
        %510 = vmatpush1.msra.mxu0 %v436
        %511 = vmatprep.subr.mxu0 0.0
        %512 = vmatpush1.msra.mxu0 %v437
        %513 = vmatprep.subr.mxu0 0.0
        %514 = vmatpush1.msra.mxu0 %v438
        %515 = vmatprep.subr.mxu0 0.0
        %516 = vmatpush1.msra.mxu0 %v439
        %517 = vmatprep.subr.mxu0 0.0
        %518 = vmatpush1.msra.mxu0 %v440
        %519 = vmatprep.subr.mxu0 0.0
        %520 = vmatpush1.msra.mxu0 %v441
        %521 = vmatprep.subr.mxu0 0.0
        %522 = vmatpush1.msra.mxu0 %v442
        %523 = vmatprep.mubr.f32.mxu0 %v457
        %524 = vmatmul.mubr.f32.gmra.mrb[0].mxu0 %v455
        %v525 = vpop.f32.mrb[0].mxu0
        %v526 = vadd.f32 0.0, %v525
        %v527 = vpop.f32.mrb[0].mxu0
        %528 = vdwg.mxu0
        %vm529 = vcmask 31744
        %v531 = vsel %vm529, %v358, 0
        %vm533 = vcmask 1043456
        %v535 = vsel %vm533, %v526, 0
        %537 = vmatprep.subr.mxu0 0.0
        %538 = vmatpush1.msra.mxu0 %v535
        %539 = vmatprep.subr.mxu0 0.0
        %540 = vmatpush1.msra.mxu0 0.0
        %541 = vmatprep.subr.mxu0 0.0
        %542 = vmatpush1.msra.mxu0 0.0
        %543 = vmatprep.subr.mxu0 0.0
        %544 = vmatpush1.msra.mxu0 0.0
        %545 = vmatprep.subr.mxu0 0.0
        %546 = vmatpush1.msra.mxu0 0.0
        %547 = vmatprep.subr.mxu0 0.0
        %548 = vmatpush1.msra.mxu0 0.0
        %549 = vmatprep.subr.mxu0 0.0
        %550 = vmatpush1.msra.mxu0 0.0
        %551 = vmatprep.subr.mxu0 0.0
        %552 = vmatpush1.msra.mxu0 0.0
        %553 = vmatprep.subr.mxu0 0.0
        %554 = vmatpush1.msra.mxu0 0.0
        %555 = vmatprep.subr.mxu0 0.0
        %556 = vmatpush1.msra.mxu0 0.0
        %557 = vmatprep.subr.mxu0 0.0
        %558 = vmatpush1.msra.mxu0 0.0
        %559 = vmatprep.subr.mxu0 0.0
        %560 = vmatpush1.msra.mxu0 0.0
        %561 = vmatprep.subr.mxu0 0.0
        %562 = vmatpush1.msra.mxu0 0.0
        %563 = vmatprep.subr.mxu0 0.0
        %564 = vmatpush1.msra.mxu0 0.0
        %565 = vmatprep.subr.mxu0 0.0
        %566 = vmatpush1.msra.mxu0 0.0
        %567 = vmatprep.subr.mxu0 0.0
        %568 = vmatpush1.msra.mxu0 0.0
        %569 = vmatprep.subr.mxu0 0.0
        %570 = vmatpush1.msra.mxu0 0.0
        %571 = vmatprep.subr.mxu0 0.0
        %572 = vmatpush1.msra.mxu0 0.0
        %573 = vmatprep.subr.mxu0 0.0
        %574 = vmatpush1.msra.mxu0 0.0
        %575 = vmatprep.subr.mxu0 0.0
        %576 = vmatpush1.msra.mxu0 0.0
        %577 = vmatprep.subr.mxu0 0.0
        %578 = vmatpush1.msra.mxu0 0.0
        %579 = vmatprep.subr.mxu0 0.0
        %580 = vmatpush1.msra.mxu0 0.0
        %581 = vmatprep.subr.mxu0 0.0
        %582 = vmatpush1.msra.mxu0 0.0
        %583 = vmatprep.subr.mxu0 0.0
        %584 = vmatpush1.msra.mxu0 0.0
        %585 = vmatprep.subr.mxu0 0.0
        %586 = vmatpush1.msra.mxu0 0.0
        %587 = vmatprep.subr.mxu0 0.0
        %588 = vmatpush1.msra.mxu0 0.0
        %589 = vmatprep.subr.mxu0 0.0
        %590 = vmatpush1.msra.mxu0 0.0
        %591 = vmatprep.subr.mxu0 0.0
        %592 = vmatpush1.msra.mxu0 0.0
        %593 = vmatprep.subr.mxu0 0.0
        %594 = vmatpush1.msra.mxu0 0.0
        %595 = vmatprep.subr.mxu0 0.0
        %596 = vmatpush1.msra.mxu0 0.0
        %597 = vmatprep.subr.mxu0 0.0
        %598 = vmatpush1.msra.mxu0 0.0
        %599 = vmatprep.subr.mxu0 0.0
        %600 = vmatpush1.msra.mxu0 0.0
        %601 = vmatprep.mubr.f32.mxu0 0.0
        %602 = vmatmul.mubr.f32.gmra.mrb[0].mxu0 %v531
        %v603 = vpop.f32.mrb[0].mxu0
        %v604 = vadd.f32 0.0, %v603
        %v605 = vpop.f32.mrb[0].mxu0
        %606 = vdwg.mxu0
        %v607 = vmul.f32 %v604, 0.0625
        %v608 = vadd.f32 %v607, %v365
        %v609 = vadd.f32 %v608, 3.0
        %v610 = vmax.f32 %v609, 0.0
        %v611 = vmin.f32 %v610, 6.0
        %v612 = vmul.f32 %v611, 0.16666667
        %v613 = vmul.f32 %v608, %v612
        %vm614 = vcmask 64512
        %v616 = vsel %vm614, %v359, 0
        %618 = vmatprep.subr.mxu0 0.0
        %619 = vmatpush1.msra.mxu0 %v613
        %620 = vmatprep.subr.mxu0 0.0
        %621 = vmatpush1.msra.mxu0 0.0
        %622 = vmatprep.subr.mxu0 0.0
        %623 = vmatpush1.msra.mxu0 0.0
        %624 = vmatprep.subr.mxu0 0.0
        %625 = vmatpush1.msra.mxu0 0.0
        %626 = vmatprep.subr.mxu0 0.0
        %627 = vmatpush1.msra.mxu0 0.0
        %628 = vmatprep.subr.mxu0 0.0
        %629 = vmatpush1.msra.mxu0 0.0
        %630 = vmatprep.subr.mxu0 0.0
        %631 = vmatpush1.msra.mxu0 0.0
        %632 = vmatprep.subr.mxu0 0.0
        %633 = vmatpush1.msra.mxu0 0.0
        %634 = vmatprep.subr.mxu0 0.0
        %635 = vmatpush1.msra.mxu0 0.0
        %636 = vmatprep.subr.mxu0 0.0
        %637 = vmatpush1.msra.mxu0 0.0
        %638 = vmatprep.subr.mxu0 0.0
        %639 = vmatpush1.msra.mxu0 0.0
        %640 = vmatprep.subr.mxu0 0.0
        %641 = vmatpush1.msra.mxu0 0.0
        %642 = vmatprep.subr.mxu0 0.0
        %643 = vmatpush1.msra.mxu0 0.0
        %644 = vmatprep.subr.mxu0 0.0
        %645 = vmatpush1.msra.mxu0 0.0
        %646 = vmatprep.subr.mxu0 0.0
        %647 = vmatpush1.msra.mxu0 0.0
        %648 = vmatprep.subr.mxu0 0.0
        %649 = vmatpush1.msra.mxu0 0.0
        %650 = vmatprep.subr.mxu0 0.0
        %651 = vmatpush1.msra.mxu0 0.0
        %652 = vmatprep.subr.mxu0 0.0
        %653 = vmatpush1.msra.mxu0 0.0
        %654 = vmatprep.subr.mxu0 0.0
        %655 = vmatpush1.msra.mxu0 0.0
        %656 = vmatprep.subr.mxu0 0.0
        %657 = vmatpush1.msra.mxu0 0.0
        %658 = vmatprep.subr.mxu0 0.0
        %659 = vmatpush1.msra.mxu0 0.0
        %660 = vmatprep.subr.mxu0 0.0
        %661 = vmatpush1.msra.mxu0 0.0
        %662 = vmatprep.subr.mxu0 0.0
        %663 = vmatpush1.msra.mxu0 0.0
        %664 = vmatprep.subr.mxu0 0.0
        %665 = vmatpush1.msra.mxu0 0.0
        %666 = vmatprep.subr.mxu0 0.0
        %667 = vmatpush1.msra.mxu0 0.0
        %668 = vmatprep.subr.mxu0 0.0
        %669 = vmatpush1.msra.mxu0 0.0
        %670 = vmatprep.subr.mxu0 0.0
        %671 = vmatpush1.msra.mxu0 0.0
        %672 = vmatprep.subr.mxu0 0.0
        %673 = vmatpush1.msra.mxu0 0.0
        %674 = vmatprep.subr.mxu0 0.0
        %675 = vmatpush1.msra.mxu0 0.0
        %676 = vmatprep.subr.mxu0 0.0
        %677 = vmatpush1.msra.mxu0 0.0
        %678 = vmatprep.subr.mxu0 0.0
        %679 = vmatpush1.msra.mxu0 0.0
        %680 = vmatprep.subr.mxu0 0.0
        %681 = vmatpush1.msra.mxu0 0.0
        %682 = vmatprep.mubr.f32.mxu0 0.0
        %683 = vmatmul.mubr.f32.gmra.mrb[0].mxu0 %v616
        %v684 = vpop.f32.mrb[0].mxu0
        %v685 = vadd.f32 %v371, %v684
        %v686 = vpop.f32.mrb[0].mxu0
        %687 = vdwg.mxu0
        %v688 = vxor.u32 %v685, 2147483648
        %v689 = vmul.f32 %v688, 1.442695
        %v690 = vpow.pop %v689
        %v691 = vadd.f32 %v690, 1.0
        %v692 = vrcp.pop %v691
        %v693 = vmul.f32 1.0, %v692
        %695 = vrot.lane.b32.xlu0 %v613, 112
        %v696 = vpop.permute.xlu0 %695
        %v699 = vsel %vm614, %v360, 0
        %701 = vmatprep.subr.mxu0 0.0
        %702 = vmatpush1.msra.mxu0 %v696
        %703 = vmatprep.subr.mxu0 0.0
        %704 = vmatpush1.msra.mxu0 0.0
        %705 = vmatprep.subr.mxu0 0.0
        %706 = vmatpush1.msra.mxu0 0.0
        %707 = vmatprep.subr.mxu0 0.0
        %708 = vmatpush1.msra.mxu0 0.0
        %709 = vmatprep.subr.mxu0 0.0
        %710 = vmatpush1.msra.mxu0 0.0
        %711 = vmatprep.subr.mxu0 0.0
        %712 = vmatpush1.msra.mxu0 0.0
        %713 = vmatprep.subr.mxu0 0.0
        %714 = vmatpush1.msra.mxu0 0.0
        %715 = vmatprep.subr.mxu0 0.0
        %716 = vmatpush1.msra.mxu0 0.0
        %717 = vmatprep.subr.mxu0 0.0
        %718 = vmatpush1.msra.mxu0 0.0
        %719 = vmatprep.subr.mxu0 0.0
        %720 = vmatpush1.msra.mxu0 0.0
        %721 = vmatprep.subr.mxu0 0.0
        %722 = vmatpush1.msra.mxu0 0.0
        %723 = vmatprep.subr.mxu0 0.0
        %724 = vmatpush1.msra.mxu0 0.0
        %725 = vmatprep.subr.mxu0 0.0
        %726 = vmatpush1.msra.mxu0 0.0
        %727 = vmatprep.subr.mxu0 0.0
        %728 = vmatpush1.msra.mxu0 0.0
        %729 = vmatprep.subr.mxu0 0.0
        %730 = vmatpush1.msra.mxu0 0.0
        %731 = vmatprep.subr.mxu0 0.0
        %732 = vmatpush1.msra.mxu0 0.0
        %733 = vmatprep.subr.mxu0 0.0
        %734 = vmatpush1.msra.mxu0 0.0
        %735 = vmatprep.subr.mxu0 0.0
        %736 = vmatpush1.msra.mxu0 0.0
        %737 = vmatprep.subr.mxu0 0.0
        %738 = vmatpush1.msra.mxu0 0.0
        %739 = vmatprep.subr.mxu0 0.0
        %740 = vmatpush1.msra.mxu0 0.0
        %741 = vmatprep.subr.mxu0 0.0
        %742 = vmatpush1.msra.mxu0 0.0
        %743 = vmatprep.subr.mxu0 0.0
        %744 = vmatpush1.msra.mxu0 0.0
        %745 = vmatprep.subr.mxu0 0.0
        %746 = vmatpush1.msra.mxu0 0.0
        %747 = vmatprep.subr.mxu0 0.0
        %748 = vmatpush1.msra.mxu0 0.0
        %749 = vmatprep.subr.mxu0 0.0
        %750 = vmatpush1.msra.mxu0 0.0
        %751 = vmatprep.subr.mxu0 0.0
        %752 = vmatpush1.msra.mxu0 0.0
        %753 = vmatprep.subr.mxu0 0.0
        %754 = vmatpush1.msra.mxu0 0.0
        %755 = vmatprep.subr.mxu0 0.0
        %756 = vmatpush1.msra.mxu0 0.0
        %757 = vmatprep.subr.mxu0 0.0
        %758 = vmatpush1.msra.mxu0 0.0
        %759 = vmatprep.subr.mxu0 0.0
        %760 = vmatpush1.msra.mxu0 0.0
        %761 = vmatprep.subr.mxu0 0.0
        %762 = vmatpush1.msra.mxu0 0.0
        %763 = vmatprep.subr.mxu0 0.0
        %764 = vmatpush1.msra.mxu0 0.0
        %765 = vmatprep.mubr.f32.mxu0 0.0
        %766 = vmatmul.mubr.f32.gmra.mrb[0].mxu0 %v699
        %v767 = vpop.f32.mrb[0].mxu0
        %v768 = vadd.f32 %v377, %v767
        %v769 = vpop.f32.mrb[0].mxu0
        %770 = vdwg.mxu0
        %v771 = vxor.u32 %v768, 2147483648
        %v772 = vmul.f32 %v771, 1.442695
        %v773 = vpow.pop %v772
        %v774 = vadd.f32 %v773, 1.0
        %v775 = vrcp.pop %v774
        %v776 = vmul.f32 1.0, %v775
        %vm777 = vcmask 130048
        %v779 = vsel %vm777, %v693, 0
        %781 = vmatprep.subr.mxu0 %v446
        %782 = vmatpush1.msra.mxu0 %v445
        %783 = vmatprep.subr.mxu0 %v448
        %784 = vmatpush1.msra.mxu0 %v447
        %785 = vmatprep.subr.mxu0 0.0
        %786 = vmatpush1.msra.mxu0 0.0
        %787 = vmatprep.subr.mxu0 0.0
        %788 = vmatpush1.msra.mxu0 0.0
        %789 = vmatprep.subr.mxu0 0.0
        %790 = vmatpush1.msra.mxu0 0.0
        %791 = vmatprep.subr.mxu0 0.0
        %792 = vmatpush1.msra.mxu0 0.0
        %793 = vmatprep.subr.mxu0 0.0
        %794 = vmatpush1.msra.mxu0 0.0
        %795 = vmatprep.subr.mxu0 0.0
        %796 = vmatpush1.msra.mxu0 0.0
        %797 = vmatprep.subr.mxu0 0.0
        %798 = vmatpush1.msra.mxu0 0.0
        %799 = vmatprep.subr.mxu0 0.0
        %800 = vmatpush1.msra.mxu0 0.0
        %801 = vmatprep.subr.mxu0 0.0
        %802 = vmatpush1.msra.mxu0 0.0
        %803 = vmatprep.subr.mxu0 0.0
        %804 = vmatpush1.msra.mxu0 0.0
        %805 = vmatprep.subr.mxu0 0.0
        %806 = vmatpush1.msra.mxu0 0.0
        %807 = vmatprep.subr.mxu0 0.0
        %808 = vmatpush1.msra.mxu0 0.0
        %809 = vmatprep.subr.mxu0 0.0
        %810 = vmatpush1.msra.mxu0 0.0
        %811 = vmatprep.subr.mxu0 0.0
        %812 = vmatpush1.msra.mxu0 0.0
        %813 = vmatprep.subr.mxu0 0.0
        %814 = vmatpush1.msra.mxu0 0.0
        %815 = vmatprep.subr.mxu0 0.0
        %816 = vmatpush1.msra.mxu0 0.0
        %817 = vmatprep.subr.mxu0 0.0
        %818 = vmatpush1.msra.mxu0 0.0
        %819 = vmatprep.subr.mxu0 0.0
        %820 = vmatpush1.msra.mxu0 0.0
        %821 = vmatprep.subr.mxu0 0.0
        %822 = vmatpush1.msra.mxu0 0.0
        %823 = vmatprep.subr.mxu0 0.0
        %824 = vmatpush1.msra.mxu0 0.0
        %825 = vmatprep.subr.mxu0 0.0
        %826 = vmatpush1.msra.mxu0 0.0
        %827 = vmatprep.subr.mxu0 0.0
        %828 = vmatpush1.msra.mxu0 0.0
        %829 = vmatprep.subr.mxu0 0.0
        %830 = vmatpush1.msra.mxu0 0.0
        %831 = vmatprep.subr.mxu0 0.0
        %832 = vmatpush1.msra.mxu0 0.0
        %833 = vmatprep.subr.mxu0 0.0
        %834 = vmatpush1.msra.mxu0 0.0
        %835 = vmatprep.subr.mxu0 0.0
        %836 = vmatpush1.msra.mxu0 0.0
        %837 = vmatprep.subr.mxu0 0.0
        %838 = vmatpush1.msra.mxu0 0.0
        %839 = vmatprep.subr.mxu0 0.0
        %840 = vmatpush1.msra.mxu0 0.0
        %841 = vmatprep.subr.mxu0 0.0
        %842 = vmatpush1.msra.mxu0 0.0
        %843 = vmatprep.subr.mxu0 0.0
        %844 = vmatpush1.msra.mxu0 0.0
        %845 = vmatprep.mubr.f32.mxu0 0.0
        %846 = vmatmul.mubr.f32.gmra.mrb[0].mxu0 %v779
        %v847 = vpop.f32.mrb[0].mxu0
        %v848 = vadd.f32 0.0, %v847
        %v849 = vpop.f32.mrb[0].mxu0
        %v850 = vadd.f32 0.0, %v849
        %851 = vdwg.mxu0
        %v853 = vsel %vm777, %v776, 0
        %855 = vmatprep.subr.mxu0 %v452
        %856 = vmatpush1.msra.mxu0 %v451
        %857 = vmatprep.subr.mxu0 %v454
        %858 = vmatpush1.msra.mxu0 %v453
        %859 = vmatprep.subr.mxu0 0.0
        %860 = vmatpush1.msra.mxu0 0.0
        %861 = vmatprep.subr.mxu0 0.0
        %862 = vmatpush1.msra.mxu0 0.0
        %863 = vmatprep.subr.mxu0 0.0
        %864 = vmatpush1.msra.mxu0 0.0
        %865 = vmatprep.subr.mxu0 0.0
        %866 = vmatpush1.msra.mxu0 0.0
        %867 = vmatprep.subr.mxu0 0.0
        %868 = vmatpush1.msra.mxu0 0.0
        %869 = vmatprep.subr.mxu0 0.0
        %870 = vmatpush1.msra.mxu0 0.0
        %871 = vmatprep.subr.mxu0 0.0
        %872 = vmatpush1.msra.mxu0 0.0
        %873 = vmatprep.subr.mxu0 0.0
        %874 = vmatpush1.msra.mxu0 0.0
        %875 = vmatprep.subr.mxu0 0.0
        %876 = vmatpush1.msra.mxu0 0.0
        %877 = vmatprep.subr.mxu0 0.0
        %878 = vmatpush1.msra.mxu0 0.0
        %879 = vmatprep.subr.mxu0 0.0
        %880 = vmatpush1.msra.mxu0 0.0
        %881 = vmatprep.subr.mxu0 0.0
        %882 = vmatpush1.msra.mxu0 0.0
        %883 = vmatprep.subr.mxu0 0.0
        %884 = vmatpush1.msra.mxu0 0.0
        %885 = vmatprep.subr.mxu0 0.0
        %886 = vmatpush1.msra.mxu0 0.0
        %887 = vmatprep.subr.mxu0 0.0
        %888 = vmatpush1.msra.mxu0 0.0
        %889 = vmatprep.subr.mxu0 0.0
        %890 = vmatpush1.msra.mxu0 0.0
        %891 = vmatprep.subr.mxu0 0.0
        %892 = vmatpush1.msra.mxu0 0.0
        %893 = vmatprep.subr.mxu0 0.0
        %894 = vmatpush1.msra.mxu0 0.0
        %895 = vmatprep.subr.mxu0 0.0
        %896 = vmatpush1.msra.mxu0 0.0
        %897 = vmatprep.subr.mxu0 0.0
        %898 = vmatpush1.msra.mxu0 0.0
        %899 = vmatprep.subr.mxu0 0.0
        %900 = vmatpush1.msra.mxu0 0.0
        %901 = vmatprep.subr.mxu0 0.0
        %902 = vmatpush1.msra.mxu0 0.0
        %903 = vmatprep.subr.mxu0 0.0
        %904 = vmatpush1.msra.mxu0 0.0
        %905 = vmatprep.subr.mxu0 0.0
        %906 = vmatpush1.msra.mxu0 0.0
        %907 = vmatprep.subr.mxu0 0.0
        %908 = vmatpush1.msra.mxu0 0.0
        %909 = vmatprep.subr.mxu0 0.0
        %910 = vmatpush1.msra.mxu0 0.0
        %911 = vmatprep.subr.mxu0 0.0
        %912 = vmatpush1.msra.mxu0 0.0
        %913 = vmatprep.subr.mxu0 0.0
        %914 = vmatpush1.msra.mxu0 0.0
        %915 = vmatprep.subr.mxu0 0.0
        %916 = vmatpush1.msra.mxu0 0.0
        %917 = vmatprep.subr.mxu0 0.0
        %918 = vmatpush1.msra.mxu0 0.0
        %919 = vmatprep.mubr.f32.mxu0 0.0
        %920 = vmatmul.mubr.f32.gmra.mrb[0].mxu0 %v853
        %v921 = vpop.f32.mrb[0].mxu0
        %v922 = vadd.f32 0.0, %v921
        %v923 = vpop.f32.mrb[0].mxu0
        %v924 = vadd.f32 0.0, %v923
        %925 = vdwg.mxu0
        %v926 = vmul.f32 %v848, %v922
        %v927 = vmul.f32 %v850, %v924
        %v930 = vcombine.low %v926, %v927
        %v932 = vmul.f32 %v455, %v930
        %933 = vst [vmem:[%s352] sm:$0xff] %v932
        %s934 = sand.u32 %s247, 1
        %s935 = scalar_lea.sflag [#allocation3], %s934
        %s936 = sand.u32 %s247, 1
        %s937 = smul.addr %s936, 8
        %s938 = scalar_lea.vmem [#allocation2], %s937
        // Predicated region
        $region61: #{tpu_custom_call.1} parent=59 // pred_check
          %p939 = pneg %p257
        $region62: #{tpu_custom_call.1} parent=59 // pred_check_branch
          %941 = sbr.rel (%p939) target = $region64
        $region63: #{tpu_custom_call.1} parent=59 // pred_region
          %s943 = ssub.s32 128, 128
          %944 = vsyncadd %s935, %s943
          %s945 = smul.addr %s24, 2
          %s946 = smul.addr %s945, 64
          %s947 = scalar_lea.hbm %s10, %s946
          %s949 = sshll.u32 %s938, 4
          %s950 = int_to_ptr.vmem [resolvable:$true] %s949
          %952 = dma.vmem_to_hbm [thread:$0]  %s950, 128, %s947, %s935
        $region64: #{tpu_custom_call.1} parent=59 // pred_fallthru
          _
      $region60: #{tpu_custom_call.1} parent=5 // pred_fallthru
        _
      %p953 = scmp.le.s32.totalorder 2, %s19
      // Predicated region
      $region65: #{tpu_custom_call.1} parent=5 // pred_check
        %p954 = pneg %p953
      $region66: #{tpu_custom_call.1} parent=5 // pred_check_branch
        %956 = sbr.rel (%p954) target = $region68
      $region67: #{tpu_custom_call.1} parent=5 // pred_region
        %s957 = ssub.s32 %s19, 2
        // Predicated region
        $region69: #{tpu_custom_call.1} parent=67 // pred_check
          %p958 = pneg %p263
        $region70: #{tpu_custom_call.1} parent=67 // pred_check_branch
          %960 = sbr.rel (%p958) target = $region72
        $region71: #{tpu_custom_call.1} parent=67 // pred_region
          %s961 = sand.u32 %s248, 1
          %s962 = scalar_lea.sflag [#allocation3], %s961
          %s963 = sand.u32 %s248, 1
          %s964 = smul.addr %s963, 8
          %s965 = scalar_lea.vmem [#allocation2], %s964
          %966 = dma.done %s962, 128
        $region72: #{tpu_custom_call.1} parent=67 // pred_fallthru
          _
      $region68: #{tpu_custom_call.1} parent=5 // pred_fallthru
        _
    $region6: #{tpu_custom_call.1} parent=1 // loop_footer
      %s23 = sadd.s32 1, %s19
    $region7: #{tpu_custom_call.1} parent=1 // loop_footer_branch
      %18 = sbr.rel target = $region3
    $region8: #{tpu_custom_call.1} parent=1 // loop_exit
      _
    %967 = vsyncpa [#allocation3], 1
    %s968 = scalar_lea.sflag [#allocation3], 1
    %969 = vsyncpa %s968, 1

</llo_original>
